<compile_context>
chip_gen: v7x
topology: tpu7x:2x2x1
jax: 0.10.0
libtpu: 0.0.40
codegen_flags: <defaults>
</compile_context>

<pallas_src>
import jax
import jax.numpy as jnp
from jax import lax
from jax.experimental import pallas as pl
from jax.experimental.pallas import tpu as pltpu


def _round_up(n, m):
    return ((n + m - 1) // m) * m


def _pad_to(a, shape):
    return jnp.pad(a, [(0, s - d) for d, s in zip(a.shape, shape)])


def _full_spec(shape):
    n = len(shape)
    return pl.BlockSpec(shape, lambda: (0,) * n)


def sign_language_kernel(x_ref, wih_ref, whh_f_ref, b_ref, wfc_ref, bfc_ref,
                         out_ref, g_ref):
    Bp = out_ref.shape[0]
    H = whh_f_ref.shape[0]
    H4 = 4 * H
    T = x_ref.shape[0] // Bp

    # ---- fused input projection (fwd | bwd), bias folded in ------------------
    # One (T*Bp, Dp) @ (Dp, 8H) MXU matmul; fills the 256-wide MXU on v6e/v7x
    # and removes the separate backward projection + its x_last DMA.
    # Gate-g columns were pre-doubled in the wrapper (tanh = 2*sigmoid(2z)-1).
    # TODO(synk): on v5e (128x128 MXU) keep the fwd/bwd projections split.
    g_ref[...] = (jnp.dot(x_ref[...], wih_ref[...],
                          preferred_element_type=jnp.float32) + b_ref[...])

    # ---- backward-direction cell ----------------------------------------------
    # The bidirectional output at t = T-1 (backward half) is exactly one
    # backward step on x[:, -1] from zero state, so h @ w_hh_b vanishes.
    # Only valid because the head reads output[:, -1].
    gb = g_ref[pl.ds((T - 1) * Bp, Bp), pl.ds(H4, H4)]
    sb = jax.nn.sigmoid(gb)                 # single full-width EUP pass
    i_b = sb[:, 0 * H:1 * H]
    g_b = 2.0 * sb[:, 2 * H:3 * H] - 1.0    # == tanh of the un-doubled preact
    o_b = sb[:, 3 * H:4 * H]
    h_bwd = o_b * jnp.tanh(i_b * g_b)       # c0 == 0 => c_new = i*g; narrow tanh

    # ---- forward-direction recurrence (serial, unrolled) ----------------------
    whh_f = whh_f_ref[...]                  # (H, 4H) bf16, g-columns pre-doubled

    def step(t, carry):
        h, c = carry
        row = pl.multiple_of(t * Bp, 8)
        pre = g_ref[pl.ds(row, Bp), pl.ds(0, H4)] + jnp.dot(
            h.astype(whh_f.dtype), whh_f, preferred_element_type=jnp.float32)
        s = jax.nn.sigmoid(pre)             # ONE full-width transcendental / step
        i = s[:, 0 * H:1 * H]
        f = s[:, 1 * H:2 * H]
        g = 2.0 * s[:, 2 * H:3 * H] - 1.0   # tanh via the shared sigmoid
        o = s[:, 3 * H:4 * H]
        c_new = f * c + i * g
        h_new = o * jnp.tanh(c_new)         # narrow (Bp, H) tanh
        return h_new, c_new

    h0 = jnp.zeros((Bp, H), jnp.float32)
    c0 = jnp.zeros((Bp, H), jnp.float32)
    # Cap the unroll so vreg pressure stays bounded at larger T (full at T=8).
    h_fwd, _ = lax.fori_loop(0, T, step, (h0, c0), unroll=min(T, 8))

    # ---- single fused fc: [h_fwd | h_bwd] @ wfc + bfc -------------------------
    h_cat = jnp.concatenate([h_fwd, h_bwd], axis=-1).astype(wfc_ref.dtype)
    out = (jnp.dot(h_cat, wfc_ref[...], preferred_element_type=jnp.float32)
           + bfc_ref[...])
    out_ref[...] = out.astype(out_ref.dtype)


def sign_language_forward(x, params):
    """x: (B, T, 15, 15) or (B, T, 225) -> (B, num_classes)."""
    (wih_f, whh_f, b_f, wih_b, whh_b, b_b, wfc, bfc) = params
    del whh_b  # h0 == 0 => w_hh_b never contributes to output[:, -1]

    if x.ndim == 4:
        B, T = x.shape[:2]
        x = x.reshape(B, T, -1)
    B, T, D = x.shape
    H = whh_f.shape[0]
    C = wfc.shape[1]

    Dp = _round_up(D, 128)            # 225 -> 256 : lane-aligned contraction
    Bp = _round_up(max(B, 8), 8)      # sublane-aligned batch
    Cp = _round_up(C, 128)            # lane-dense output store

    # Time-major, zero-padded; cast to bf16 BEFORE the transpose/pad so those
    # mem-bound XLA reshuffles move half the bytes. f32 accumulation in-kernel.
    x_tm = _pad_to(jnp.transpose(x.astype(jnp.bfloat16), (1, 0, 2)), (T, Bp, Dp))
    x2d = x_tm.reshape(T * Bp, Dp)

    # Pre-double the gate-g (tanh) columns of the LSTM weights/biases so the
    # kernel realises tanh(z) = 2*sigmoid(2z) - 1 with no per-step pre-scaling
    # (doubling is exact in floating point).
    g_scale = jnp.ones((4 * H,), jnp.float32).at[2 * H:3 * H].set(2.0)

    wih = jnp.concatenate([wih_f * g_scale, wih_b * g_scale], axis=1)
    wih_p = _pad_to(wih, (Dp, 8 * H)).astype(jnp.bfloat16)
    whh_f_p = (whh_f * g_scale).astype(jnp.bfloat16)
    b_p = jnp.concatenate([b_f * g_scale, b_b * g_scale], axis=1).astype(jnp.float32)
    wfc_p = _pad_to(wfc, (2 * H, Cp)).astype(jnp.bfloat16)
    bfc_p = _pad_to(bfc, (1, Cp)).astype(jnp.float32)

    args = (x2d, wih_p, whh_f_p, b_p, wfc_p, bfc_p)

    # TODO(synk): at production scale (large T*B) stream x over a T grid axis
    # ("arbitrary", h/c carried in VMEM scratch, pl.when init) and add a
    # parallel batch axis so the slab fits v7x's 64 MiB VMEM (32 MiB scoped
    # default) and both of its TensorCores are used.
    out = pl.pallas_call(
        sign_language_kernel,
        out_shape=jax.ShapeDtypeStruct((Bp, Cp), jnp.float32),
        in_specs=[_full_spec(a.shape) for a in args],
        out_specs=_full_spec((Bp, Cp)),
        scratch_shapes=[pltpu.VMEM((T * Bp, 8 * H), jnp.float32)],
    )(*args)
    return out[:B, :C]


def reference_forward(x, params):
    """Pure-JAX f32 reference of the PyTorch module (full backward scan)."""
    (wih_f, whh_f, b_f, wih_b, whh_b, b_b, wfc, bfc) = params
    if x.ndim == 4:
        B, T = x.shape[:2]
        x = x.reshape(B, T, -1)
    B, T, _ = x.shape
    H = whh_f.shape[0]

    def cell(h, c, xt, wih, whh, b):
        pre = xt @ wih + h @ whh + b[0]
        i = jax.nn.sigmoid(pre[:, 0:H])
        f = jax.nn.sigmoid(pre[:, H:2 * H])
        g = jnp.tanh(pre[:, 2 * H:3 * H])
        o = jax.nn.sigmoid(pre[:, 3 * H:4 * H])
        c = f * c + i * g
        h = o * jnp.tanh(c)
        return h, c

    hf = cf = jnp.zeros((B, H), jnp.float32)
    for t in range(T):
        hf, cf = cell(hf, cf, x[:, t], wih_f, whh_f, b_f)

    hb = cb = jnp.zeros((B, H), jnp.float32)
    h_bwd_last = None
    for t in range(T - 1, -1, -1):          # full reversed scan (uses whh_b)
        hb, cb = cell(hb, cb, x[:, t], wih_b, whh_b, b_b)
        if t == T - 1:
            h_bwd_last = hb                 # backward output at time T-1

    return jnp.concatenate([hf, h_bwd_last], axis=-1) @ wfc + bfc[0]


def init_params(key, input_size=225, hidden_size=32, num_classes=10):
    """Deterministic synthetic parameters (PyTorch-style U(-1/sqrt(H), 1/sqrt(H)))."""
    H = hidden_size
    bound = float(1.0 / (H ** 0.5))
    ks = jax.random.split(key, 10)

    def u(k, shape):
        return jax.random.uniform(k, shape, jnp.float32, -bound, bound)

    # PyTorch stores weight_ih_l0: (4H, D) etc.; we keep the transposed layout.
    wih_f = u(ks[0], (input_size, 4 * H))
    whh_f = u(ks[1], (H, 4 * H))
    b_f = u(ks[2], (1, 4 * H)) + u(ks[3], (1, 4 * H))      # b_ih + b_hh
    wih_b = u(ks[4], (input_size, 4 * H))
    whh_b = u(ks[5], (H, 4 * H))
    b_b = u(ks[6], (1, 4 * H)) + u(ks[7], (1, 4 * H))
    wfc = u(ks[8], (2 * H, num_classes))
    bfc = u(ks[9], (1, num_classes))
    return (wih_f, whh_f, b_f, wih_b, whh_b, b_b, wfc, bfc)


if __name__ == "__main__":
    key = jax.random.PRNGKey(0)
    kx, kp = jax.random.split(key)

    B, T = 2, 8
    hidden_size, num_classes = 32, 10

    # 4-D input, matching the x.dim() == 4 branch: 15*15 = 225 = LSTM input_size.
    x = jax.random.normal(kx, (B, T, 15, 15), jnp.float32)
    params = init_params(kp, input_size=225,
                         hidden_size=hidden_size, num_classes=num_classes)

    out = jax.block_until_ready(sign_language_forward(x, params))
    assert out.shape == (B, num_classes) and out.dtype == jnp.float32

    ref = jax.block_until_ready(reference_forward(x, params))
    err = float(jnp.max(jnp.abs(out - ref)))
    # bf16 operands vs f32 reference: tolerance covers rounding compounded over T=8.
    assert err < 5e-2, f"max |kernel - reference| = {err}"
    print("KERNEL_OK")
</pallas_src>

<mosaic_0001>
module attributes {stable_mosaic.version = 11 : i64} {
  func.func @sign_language_kernel(%arg0: memref<64x256xbf16, #tpu.memory_space<vmem>>, %arg1: memref<256x256xbf16, #tpu.memory_space<vmem>>, %arg2: memref<32x128xbf16, #tpu.memory_space<vmem>>, %arg3: memref<1x256xf32, #tpu.memory_space<vmem>>, %arg4: memref<64x128xbf16, #tpu.memory_space<vmem>>, %arg5: memref<1x128xf32, #tpu.memory_space<vmem>>, %arg6: memref<8x128xf32, #tpu.memory_space<vmem>>, %arg7: memref<64x256xf32, #tpu.memory_space<vmem>>) attributes {dimension_semantics = [], scalar_prefetch = 0 : i64, scratch_operands = 1 : i64, tpu.core_type = #tpu.core_type<tc>} {
    %c0 = arith.constant 0 : index
    %c0_0 = arith.constant 0 : index
    %0 = vector.load %arg0[%c0, %c0_0] : memref<64x256xbf16, #tpu.memory_space<vmem>>, vector<64x256xbf16>
    %c0_1 = arith.constant 0 : index
    %c0_2 = arith.constant 0 : index
    %1 = vector.load %arg1[%c0_1, %c0_2] : memref<256x256xbf16, #tpu.memory_space<vmem>>, vector<256x256xbf16>
    %cst = arith.constant dense<0.000000e+00> : vector<64x256xf32>
    %2 = tpu.matmul %0, %1, %cst {dimension_numbers = #tpu.dot_dimension_numbers<[1], [0], [0], [1], [0, 0, 1, 1], [], []>} : vector<64x256xbf16>, vector<256x256xbf16>, vector<64x256xf32> -> vector<64x256xf32>
    %c0_3 = arith.constant 0 : index
    %c0_4 = arith.constant 0 : index
    %3 = vector.load %arg3[%c0_3, %c0_4] : memref<1x256xf32, #tpu.memory_space<vmem>>, vector<1x256xf32>
    %4 = vector.broadcast %3 : vector<1x256xf32> to vector<64x256xf32>
    %5 = arith.addf %2, %4 : vector<64x256xf32>
    %c0_5 = arith.constant 0 : index
    %c0_6 = arith.constant 0 : index
    %6 = vector.load %arg7[%c0_5, %c0_6] : memref<64x256xf32, #tpu.memory_space<vmem>>, vector<64x256xf32>
    tpu.vector_store %arg7[%c0_5, %c0_6], %5 {strides = array<i32>} : memref<64x256xf32, #tpu.memory_space<vmem>>, vector<64x256xf32>,
    %c56 = arith.constant 56 : index
    %c128 = arith.constant 128 : index
    %7 = vector.load %arg7[%c56, %c128] : memref<64x256xf32, #tpu.memory_space<vmem>>, vector<8x128xf32>
    %8 = arith.negf %7 : vector<8x128xf32>
    %9 = math.exp %8 : vector<8x128xf32>
    %cst_7 = arith.constant 1.000000e+00 : f32
    %10 = vector.broadcast %cst_7 : f32 to vector<8x128xf32>
    %11 = arith.addf %10, %9 : vector<8x128xf32>
    %12 = arith.divf %10, %11 : vector<8x128xf32>
    %13 = vector.extract_strided_slice %12 {offsets = [0, 0], sizes = [8, 32], strides = [1, 1]} : vector<8x128xf32> to vector<8x32xf32>
    %14 = vector.extract_strided_slice %12 {offsets = [0, 64], sizes = [8, 32], strides = [1, 1]} : vector<8x128xf32> to vector<8x32xf32>
    %cst_8 = arith.constant 2.000000e+00 : f32
    %15 = vector.broadcast %cst_8 : f32 to vector<8x32xf32>
    %16 = arith.mulf %15, %14 : vector<8x32xf32>
    %cst_9 = arith.constant 1.000000e+00 : f32
    %17 = vector.broadcast %cst_9 : f32 to vector<8x32xf32>
    %18 = arith.subf %16, %17 : vector<8x32xf32>
    %19 = vector.extract_strided_slice %12 {offsets = [0, 96], sizes = [8, 32], strides = [1, 1]} : vector<8x128xf32> to vector<8x32xf32>
    %20 = arith.mulf %13, %18 : vector<8x32xf32>
    %21 = math.tanh %20 : vector<8x32xf32>
    %22 = arith.mulf %19, %21 : vector<8x32xf32>
    %c0_10 = arith.constant 0 : index
    %c0_11 = arith.constant 0 : index
    %23 = vector.load %arg2[%c0_10, %c0_11] : memref<32x128xbf16, #tpu.memory_space<vmem>>, vector<32x128xbf16>
    %cst_12 = arith.constant 0.000000e+00 : f32
    %24 = vector.broadcast %cst_12 : f32 to vector<8x32xf32>
    %cst_13 = arith.constant 0.000000e+00 : f32
    %25 = vector.broadcast %cst_13 : f32 to vector<8x32xf32>
    %c0_i32 = arith.constant 0 : i32
    %c8_i32 = arith.constant 8 : i32
    %26 = arith.muli %c0_i32, %c8_i32 : i32
    %27 = tpu.assume_multiple %26, 8 : i32
    %28 = arith.index_cast %27 : i32 to index
    %c0_14 = arith.constant 0 : index
    %29 = vector.load %arg7[%28, %c0_14] : memref<64x256xf32, #tpu.memory_space<vmem>>, vector<8x128xf32>
    %30 = arith.truncf %24 : vector<8x32xf32> to vector<8x32xbf16>
    %cst_15 = arith.constant dense<0.000000e+00> : vector<8x128xf32>
    %31 = tpu.matmul %30, %23, %cst_15 {dimension_numbers = #tpu.dot_dimension_numbers<[1], [0], [0], [1], [0, 0, 1, 1], [], []>} : vector<8x32xbf16>, vector<32x128xbf16>, vector<8x128xf32> -> vector<8x128xf32>
    %32 = arith.addf %29, %31 : vector<8x128xf32>
    %33 = arith.negf %32 : vector<8x128xf32>
    %34 = math.exp %33 : vector<8x128xf32>
    %cst_16 = arith.constant 1.000000e+00 : f32
    %35 = vector.broadcast %cst_16 : f32 to vector<8x128xf32>
    %36 = arith.addf %35, %34 : vector<8x128xf32>
    %37 = arith.divf %35, %36 : vector<8x128xf32>
    %38 = vector.extract_strided_slice %37 {offsets = [0, 0], sizes = [8, 32], strides = [1, 1]} : vector<8x128xf32> to vector<8x32xf32>
    %39 = vector.extract_strided_slice %37 {offsets = [0, 32], sizes = [8, 32], strides = [1, 1]} : vector<8x128xf32> to vector<8x32xf32>
    %40 = vector.extract_strided_slice %37 {offsets = [0, 64], sizes = [8, 32], strides = [1, 1]} : vector<8x128xf32> to vector<8x32xf32>
    %cst_17 = arith.constant 2.000000e+00 : f32
    %41 = vector.broadcast %cst_17 : f32 to vector<8x32xf32>
    %42 = arith.mulf %41, %40 : vector<8x32xf32>
    %cst_18 = arith.constant 1.000000e+00 : f32
    %43 = vector.broadcast %cst_18 : f32 to vector<8x32xf32>
    %44 = arith.subf %42, %43 : vector<8x32xf32>
    %45 = vector.extract_strided_slice %37 {offsets = [0, 96], sizes = [8, 32], strides = [1, 1]} : vector<8x128xf32> to vector<8x32xf32>
    %46 = arith.mulf %39, %25 : vector<8x32xf32>
    %47 = arith.mulf %38, %44 : vector<8x32xf32>
    %48 = arith.addf %46, %47 : vector<8x32xf32>
    %49 = math.tanh %48 : vector<8x32xf32>
    %50 = arith.mulf %45, %49 : vector<8x32xf32>
    %c1_i32 = arith.constant 1 : i32
    %c8_i32_19 = arith.constant 8 : i32
    %51 = arith.muli %c1_i32, %c8_i32_19 : i32
    %52 = tpu.assume_multiple %51, 8 : i32
    %53 = arith.index_cast %52 : i32 to index
    %c0_20 = arith.constant 0 : index
    %54 = vector.load %arg7[%53, %c0_20] : memref<64x256xf32, #tpu.memory_space<vmem>>, vector<8x128xf32>
    %55 = arith.truncf %50 : vector<8x32xf32> to vector<8x32xbf16>
    %cst_21 = arith.constant dense<0.000000e+00> : vector<8x128xf32>
    %56 = tpu.matmul %55, %23, %cst_21 {dimension_numbers = #tpu.dot_dimension_numbers<[1], [0], [0], [1], [0, 0, 1, 1], [], []>} : vector<8x32xbf16>, vector<32x128xbf16>, vector<8x128xf32> -> vector<8x128xf32>
    %57 = arith.addf %54, %56 : vector<8x128xf32>
    %58 = arith.negf %57 : vector<8x128xf32>
    %59 = math.exp %58 : vector<8x128xf32>
    %cst_22 = arith.constant 1.000000e+00 : f32
    %60 = vector.broadcast %cst_22 : f32 to vector<8x128xf32>
    %61 = arith.addf %60, %59 : vector<8x128xf32>
    %62 = arith.divf %60, %61 : vector<8x128xf32>
    %63 = vector.extract_strided_slice %62 {offsets = [0, 0], sizes = [8, 32], strides = [1, 1]} : vector<8x128xf32> to vector<8x32xf32>
    %64 = vector.extract_strided_slice %62 {offsets = [0, 32], sizes = [8, 32], strides = [1, 1]} : vector<8x128xf32> to vector<8x32xf32>
    %65 = vector.extract_strided_slice %62 {offsets = [0, 64], sizes = [8, 32], strides = [1, 1]} : vector<8x128xf32> to vector<8x32xf32>
    %cst_23 = arith.constant 2.000000e+00 : f32
    %66 = vector.broadcast %cst_23 : f32 to vector<8x32xf32>
    %67 = arith.mulf %66, %65 : vector<8x32xf32>
    %cst_24 = arith.constant 1.000000e+00 : f32
    %68 = vector.broadcast %cst_24 : f32 to vector<8x32xf32>
    %69 = arith.subf %67, %68 : vector<8x32xf32>
    %70 = vector.extract_strided_slice %62 {offsets = [0, 96], sizes = [8, 32], strides = [1, 1]} : vector<8x128xf32> to vector<8x32xf32>
    %71 = arith.mulf %64, %48 : vector<8x32xf32>
    %72 = arith.mulf %63, %69 : vector<8x32xf32>
    %73 = arith.addf %71, %72 : vector<8x32xf32>
    %74 = math.tanh %73 : vector<8x32xf32>
    %75 = arith.mulf %70, %74 : vector<8x32xf32>
    %c2_i32 = arith.constant 2 : i32
    %c8_i32_25 = arith.constant 8 : i32
    %76 = arith.muli %c2_i32, %c8_i32_25 : i32
    %77 = tpu.assume_multiple %76, 8 : i32
    %78 = arith.index_cast %77 : i32 to index
    %c0_26 = arith.constant 0 : index
    %79 = vector.load %arg7[%78, %c0_26] : memref<64x256xf32, #tpu.memory_space<vmem>>, vector<8x128xf32>
    %80 = arith.truncf %75 : vector<8x32xf32> to vector<8x32xbf16>
    %cst_27 = arith.constant dense<0.000000e+00> : vector<8x128xf32>
    %81 = tpu.matmul %80, %23, %cst_27 {dimension_numbers = #tpu.dot_dimension_numbers<[1], [0], [0], [1], [0, 0, 1, 1], [], []>} : vector<8x32xbf16>, vector<32x128xbf16>, vector<8x128xf32> -> vector<8x128xf32>
    %82 = arith.addf %79, %81 : vector<8x128xf32>
    %83 = arith.negf %82 : vector<8x128xf32>
    %84 = math.exp %83 : vector<8x128xf32>
    %cst_28 = arith.constant 1.000000e+00 : f32
    %85 = vector.broadcast %cst_28 : f32 to vector<8x128xf32>
    %86 = arith.addf %85, %84 : vector<8x128xf32>
    %87 = arith.divf %85, %86 : vector<8x128xf32>
    %88 = vector.extract_strided_slice %87 {offsets = [0, 0], sizes = [8, 32], strides = [1, 1]} : vector<8x128xf32> to vector<8x32xf32>
    %89 = vector.extract_strided_slice %87 {offsets = [0, 32], sizes = [8, 32], strides = [1, 1]} : vector<8x128xf32> to vector<8x32xf32>
    %90 = vector.extract_strided_slice %87 {offsets = [0, 64], sizes = [8, 32], strides = [1, 1]} : vector<8x128xf32> to vector<8x32xf32>
    %cst_29 = arith.constant 2.000000e+00 : f32
    %91 = vector.broadcast %cst_29 : f32 to vector<8x32xf32>
    %92 = arith.mulf %91, %90 : vector<8x32xf32>
    %cst_30 = arith.constant 1.000000e+00 : f32
    %93 = vector.broadcast %cst_30 : f32 to vector<8x32xf32>
    %94 = arith.subf %92, %93 : vector<8x32xf32>
    %95 = vector.extract_strided_slice %87 {offsets = [0, 96], sizes = [8, 32], strides = [1, 1]} : vector<8x128xf32> to vector<8x32xf32>
    %96 = arith.mulf %89, %73 : vector<8x32xf32>
    %97 = arith.mulf %88, %94 : vector<8x32xf32>
    %98 = arith.addf %96, %97 : vector<8x32xf32>
    %99 = math.tanh %98 : vector<8x32xf32>
    %100 = arith.mulf %95, %99 : vector<8x32xf32>
    %c3_i32 = arith.constant 3 : i32
    %c8_i32_31 = arith.constant 8 : i32
    %101 = arith.muli %c3_i32, %c8_i32_31 : i32
    %102 = tpu.assume_multiple %101, 8 : i32
    %103 = arith.index_cast %102 : i32 to index
    %c0_32 = arith.constant 0 : index
    %104 = vector.load %arg7[%103, %c0_32] : memref<64x256xf32, #tpu.memory_space<vmem>>, vector<8x128xf32>
    %105 = arith.truncf %100 : vector<8x32xf32> to vector<8x32xbf16>
    %cst_33 = arith.constant dense<0.000000e+00> : vector<8x128xf32>
    %106 = tpu.matmul %105, %23, %cst_33 {dimension_numbers = #tpu.dot_dimension_numbers<[1], [0], [0], [1], [0, 0, 1, 1], [], []>} : vector<8x32xbf16>, vector<32x128xbf16>, vector<8x128xf32> -> vector<8x128xf32>
    %107 = arith.addf %104, %106 : vector<8x128xf32>
    %108 = arith.negf %107 : vector<8x128xf32>
    %109 = math.exp %108 : vector<8x128xf32>
    %cst_34 = arith.constant 1.000000e+00 : f32
    %110 = vector.broadcast %cst_34 : f32 to vector<8x128xf32>
    %111 = arith.addf %110, %109 : vector<8x128xf32>
    %112 = arith.divf %110, %111 : vector<8x128xf32>
    %113 = vector.extract_strided_slice %112 {offsets = [0, 0], sizes = [8, 32], strides = [1, 1]} : vector<8x128xf32> to vector<8x32xf32>
    %114 = vector.extract_strided_slice %112 {offsets = [0, 32], sizes = [8, 32], strides = [1, 1]} : vector<8x128xf32> to vector<8x32xf32>
    %115 = vector.extract_strided_slice %112 {offsets = [0, 64], sizes = [8, 32], strides = [1, 1]} : vector<8x128xf32> to vector<8x32xf32>
    %cst_35 = arith.constant 2.000000e+00 : f32
    %116 = vector.broadcast %cst_35 : f32 to vector<8x32xf32>
    %117 = arith.mulf %116, %115 : vector<8x32xf32>
    %cst_36 = arith.constant 1.000000e+00 : f32
    %118 = vector.broadcast %cst_36 : f32 to vector<8x32xf32>
    %119 = arith.subf %117, %118 : vector<8x32xf32>
    %120 = vector.extract_strided_slice %112 {offsets = [0, 96], sizes = [8, 32], strides = [1, 1]} : vector<8x128xf32> to vector<8x32xf32>
    %121 = arith.mulf %114, %98 : vector<8x32xf32>
    %122 = arith.mulf %113, %119 : vector<8x32xf32>
    %123 = arith.addf %121, %122 : vector<8x32xf32>
    %124 = math.tanh %123 : vector<8x32xf32>
    %125 = arith.mulf %120, %124 : vector<8x32xf32>
    %c4_i32 = arith.constant 4 : i32
    %c8_i32_37 = arith.constant 8 : i32
    %126 = arith.muli %c4_i32, %c8_i32_37 : i32
    %127 = tpu.assume_multiple %126, 8 : i32
    %128 = arith.index_cast %127 : i32 to index
    %c0_38 = arith.constant 0 : index
    %129 = vector.load %arg7[%128, %c0_38] : memref<64x256xf32, #tpu.memory_space<vmem>>, vector<8x128xf32>
    %130 = arith.truncf %125 : vector<8x32xf32> to vector<8x32xbf16>
    %cst_39 = arith.constant dense<0.000000e+00> : vector<8x128xf32>
    %131 = tpu.matmul %130, %23, %cst_39 {dimension_numbers = #tpu.dot_dimension_numbers<[1], [0], [0], [1], [0, 0, 1, 1], [], []>} : vector<8x32xbf16>, vector<32x128xbf16>, vector<8x128xf32> -> vector<8x128xf32>
    %132 = arith.addf %129, %131 : vector<8x128xf32>
    %133 = arith.negf %132 : vector<8x128xf32>
    %134 = math.exp %133 : vector<8x128xf32>
    %cst_40 = arith.constant 1.000000e+00 : f32
    %135 = vector.broadcast %cst_40 : f32 to vector<8x128xf32>
    %136 = arith.addf %135, %134 : vector<8x128xf32>
    %137 = arith.divf %135, %136 : vector<8x128xf32>
    %138 = vector.extract_strided_slice %137 {offsets = [0, 0], sizes = [8, 32], strides = [1, 1]} : vector<8x128xf32> to vector<8x32xf32>
    %139 = vector.extract_strided_slice %137 {offsets = [0, 32], sizes = [8, 32], strides = [1, 1]} : vector<8x128xf32> to vector<8x32xf32>
    %140 = vector.extract_strided_slice %137 {offsets = [0, 64], sizes = [8, 32], strides = [1, 1]} : vector<8x128xf32> to vector<8x32xf32>
    %cst_41 = arith.constant 2.000000e+00 : f32
    %141 = vector.broadcast %cst_41 : f32 to vector<8x32xf32>
    %142 = arith.mulf %141, %140 : vector<8x32xf32>
    %cst_42 = arith.constant 1.000000e+00 : f32
    %143 = vector.broadcast %cst_42 : f32 to vector<8x32xf32>
    %144 = arith.subf %142, %143 : vector<8x32xf32>
    %145 = vector.extract_strided_slice %137 {offsets = [0, 96], sizes = [8, 32], strides = [1, 1]} : vector<8x128xf32> to vector<8x32xf32>
    %146 = arith.mulf %139, %123 : vector<8x32xf32>
    %147 = arith.mulf %138, %144 : vector<8x32xf32>
    %148 = arith.addf %146, %147 : vector<8x32xf32>
    %149 = math.tanh %148 : vector<8x32xf32>
    %150 = arith.mulf %145, %149 : vector<8x32xf32>
    %c5_i32 = arith.constant 5 : i32
    %c8_i32_43 = arith.constant 8 : i32
    %151 = arith.muli %c5_i32, %c8_i32_43 : i32
    %152 = tpu.assume_multiple %151, 8 : i32
    %153 = arith.index_cast %152 : i32 to index
    %c0_44 = arith.constant 0 : index
    %154 = vector.load %arg7[%153, %c0_44] : memref<64x256xf32, #tpu.memory_space<vmem>>, vector<8x128xf32>
    %155 = arith.truncf %150 : vector<8x32xf32> to vector<8x32xbf16>
    %cst_45 = arith.constant dense<0.000000e+00> : vector<8x128xf32>
    %156 = tpu.matmul %155, %23, %cst_45 {dimension_numbers = #tpu.dot_dimension_numbers<[1], [0], [0], [1], [0, 0, 1, 1], [], []>} : vector<8x32xbf16>, vector<32x128xbf16>, vector<8x128xf32> -> vector<8x128xf32>
    %157 = arith.addf %154, %156 : vector<8x128xf32>
    %158 = arith.negf %157 : vector<8x128xf32>
    %159 = math.exp %158 : vector<8x128xf32>
    %cst_46 = arith.constant 1.000000e+00 : f32
    %160 = vector.broadcast %cst_46 : f32 to vector<8x128xf32>
    %161 = arith.addf %160, %159 : vector<8x128xf32>
    %162 = arith.divf %160, %161 : vector<8x128xf32>
    %163 = vector.extract_strided_slice %162 {offsets = [0, 0], sizes = [8, 32], strides = [1, 1]} : vector<8x128xf32> to vector<8x32xf32>
    %164 = vector.extract_strided_slice %162 {offsets = [0, 32], sizes = [8, 32], strides = [1, 1]} : vector<8x128xf32> to vector<8x32xf32>
    %165 = vector.extract_strided_slice %162 {offsets = [0, 64], sizes = [8, 32], strides = [1, 1]} : vector<8x128xf32> to vector<8x32xf32>
    %cst_47 = arith.constant 2.000000e+00 : f32
    %166 = vector.broadcast %cst_47 : f32 to vector<8x32xf32>
    %167 = arith.mulf %166, %165 : vector<8x32xf32>
    %cst_48 = arith.constant 1.000000e+00 : f32
    %168 = vector.broadcast %cst_48 : f32 to vector<8x32xf32>
    %169 = arith.subf %167, %168 : vector<8x32xf32>
    %170 = vector.extract_strided_slice %162 {offsets = [0, 96], sizes = [8, 32], strides = [1, 1]} : vector<8x128xf32> to vector<8x32xf32>
    %171 = arith.mulf %164, %148 : vector<8x32xf32>
    %172 = arith.mulf %163, %169 : vector<8x32xf32>
    %173 = arith.addf %171, %172 : vector<8x32xf32>
    %174 = math.tanh %173 : vector<8x32xf32>
    %175 = arith.mulf %170, %174 : vector<8x32xf32>
    %c6_i32 = arith.constant 6 : i32
    %c8_i32_49 = arith.constant 8 : i32
    %176 = arith.muli %c6_i32, %c8_i32_49 : i32
    %177 = tpu.assume_multiple %176, 8 : i32
    %178 = arith.index_cast %177 : i32 to index
    %c0_50 = arith.constant 0 : index
    %179 = vector.load %arg7[%178, %c0_50] : memref<64x256xf32, #tpu.memory_space<vmem>>, vector<8x128xf32>
    %180 = arith.truncf %175 : vector<8x32xf32> to vector<8x32xbf16>
    %cst_51 = arith.constant dense<0.000000e+00> : vector<8x128xf32>
    %181 = tpu.matmul %180, %23, %cst_51 {dimension_numbers = #tpu.dot_dimension_numbers<[1], [0], [0], [1], [0, 0, 1, 1], [], []>} : vector<8x32xbf16>, vector<32x128xbf16>, vector<8x128xf32> -> vector<8x128xf32>
    %182 = arith.addf %179, %181 : vector<8x128xf32>
    %183 = arith.negf %182 : vector<8x128xf32>
    %184 = math.exp %183 : vector<8x128xf32>
    %cst_52 = arith.constant 1.000000e+00 : f32
    %185 = vector.broadcast %cst_52 : f32 to vector<8x128xf32>
    %186 = arith.addf %185, %184 : vector<8x128xf32>
    %187 = arith.divf %185, %186 : vector<8x128xf32>
    %188 = vector.extract_strided_slice %187 {offsets = [0, 0], sizes = [8, 32], strides = [1, 1]} : vector<8x128xf32> to vector<8x32xf32>
    %189 = vector.extract_strided_slice %187 {offsets = [0, 32], sizes = [8, 32], strides = [1, 1]} : vector<8x128xf32> to vector<8x32xf32>
    %190 = vector.extract_strided_slice %187 {offsets = [0, 64], sizes = [8, 32], strides = [1, 1]} : vector<8x128xf32> to vector<8x32xf32>
    %cst_53 = arith.constant 2.000000e+00 : f32
    %191 = vector.broadcast %cst_53 : f32 to vector<8x32xf32>
    %192 = arith.mulf %191, %190 : vector<8x32xf32>
    %cst_54 = arith.constant 1.000000e+00 : f32
    %193 = vector.broadcast %cst_54 : f32 to vector<8x32xf32>
    %194 = arith.subf %192, %193 : vector<8x32xf32>
    %195 = vector.extract_strided_slice %187 {offsets = [0, 96], sizes = [8, 32], strides = [1, 1]} : vector<8x128xf32> to vector<8x32xf32>
    %196 = arith.mulf %189, %173 : vector<8x32xf32>
    %197 = arith.mulf %188, %194 : vector<8x32xf32>
    %198 = arith.addf %196, %197 : vector<8x32xf32>
    %199 = math.tanh %198 : vector<8x32xf32>
    %200 = arith.mulf %195, %199 : vector<8x32xf32>
    %c7_i32 = arith.constant 7 : i32
    %c8_i32_55 = arith.constant 8 : i32
    %201 = arith.muli %c7_i32, %c8_i32_55 : i32
    %202 = tpu.assume_multiple %201, 8 : i32
    %203 = arith.index_cast %202 : i32 to index
    %c0_56 = arith.constant 0 : index
    %204 = vector.load %arg7[%203, %c0_56] : memref<64x256xf32, #tpu.memory_space<vmem>>, vector<8x128xf32>
    %205 = arith.truncf %200 : vector<8x32xf32> to vector<8x32xbf16>
    %cst_57 = arith.constant dense<0.000000e+00> : vector<8x128xf32>
    %206 = tpu.matmul %205, %23, %cst_57 {dimension_numbers = #tpu.dot_dimension_numbers<[1], [0], [0], [1], [0, 0, 1, 1], [], []>} : vector<8x32xbf16>, vector<32x128xbf16>, vector<8x128xf32> -> vector<8x128xf32>
    %207 = arith.addf %204, %206 : vector<8x128xf32>
    %208 = arith.negf %207 : vector<8x128xf32>
    %209 = math.exp %208 : vector<8x128xf32>
    %cst_58 = arith.constant 1.000000e+00 : f32
    %210 = vector.broadcast %cst_58 : f32 to vector<8x128xf32>
    %211 = arith.addf %210, %209 : vector<8x128xf32>
    %212 = arith.divf %210, %211 : vector<8x128xf32>
    %213 = vector.extract_strided_slice %212 {offsets = [0, 0], sizes = [8, 32], strides = [1, 1]} : vector<8x128xf32> to vector<8x32xf32>
    %214 = vector.extract_strided_slice %212 {offsets = [0, 32], sizes = [8, 32], strides = [1, 1]} : vector<8x128xf32> to vector<8x32xf32>
    %215 = vector.extract_strided_slice %212 {offsets = [0, 64], sizes = [8, 32], strides = [1, 1]} : vector<8x128xf32> to vector<8x32xf32>
    %cst_59 = arith.constant 2.000000e+00 : f32
    %216 = vector.broadcast %cst_59 : f32 to vector<8x32xf32>
    %217 = arith.mulf %216, %215 : vector<8x32xf32>
    %cst_60 = arith.constant 1.000000e+00 : f32
    %218 = vector.broadcast %cst_60 : f32 to vector<8x32xf32>
    %219 = arith.subf %217, %218 : vector<8x32xf32>
    %220 = vector.extract_strided_slice %212 {offsets = [0, 96], sizes = [8, 32], strides = [1, 1]} : vector<8x128xf32> to vector<8x32xf32>
    %221 = arith.mulf %214, %198 : vector<8x32xf32>
    %222 = arith.mulf %213, %219 : vector<8x32xf32>
    %223 = arith.addf %221, %222 : vector<8x32xf32>
    %224 = math.tanh %223 : vector<8x32xf32>
    %225 = arith.mulf %220, %224 : vector<8x32xf32>
    %c8_i32_61 = arith.constant 8 : i32
    %226 = tpu.concatenate %225, %22 in 1 : vector<8x32xf32>, vector<8x32xf32> -> vector<8x64xf32>
    %227 = arith.truncf %226 : vector<8x64xf32> to vector<8x64xbf16>
    %c0_62 = arith.constant 0 : index
    %c0_63 = arith.constant 0 : index
    %228 = vector.load %arg4[%c0_62, %c0_63] : memref<64x128xbf16, #tpu.memory_space<vmem>>, vector<64x128xbf16>
    %cst_64 = arith.constant dense<0.000000e+00> : vector<8x128xf32>
    %229 = tpu.matmul %227, %228, %cst_64 {dimension_numbers = #tpu.dot_dimension_numbers<[1], [0], [0], [1], [0, 0, 1, 1], [], []>} : vector<8x64xbf16>, vector<64x128xbf16>, vector<8x128xf32> -> vector<8x128xf32>
    %c0_65 = arith.constant 0 : index
    %c0_66 = arith.constant 0 : index
    %230 = vector.load %arg5[%c0_65, %c0_66] : memref<1x128xf32, #tpu.memory_space<vmem>>, vector<1x128xf32>
    %231 = vector.broadcast %230 : vector<1x128xf32> to vector<8x128xf32>
    %232 = arith.addf %229, %231 : vector<8x128xf32>
    %c0_67 = arith.constant 0 : index
    %c0_68 = arith.constant 0 : index
    %233 = vector.load %arg6[%c0_67, %c0_68] : memref<8x128xf32, #tpu.memory_space<vmem>>, vector<8x128xf32>
    tpu.vector_store %arg6[%c0_67, %c0_68], %232 {strides = array<i32>} : memref<8x128xf32, #tpu.memory_space<vmem>>, vector<8x128xf32>,
    return
  }
}

</mosaic_0001>

<llo_original>
// kernel: tpu_custom_call.1
$region0: #{tpu_custom_call.1}
  #allocation0 [shape = 'u32[]', space=smem, size = 0x4, offset = 0x4, fixed_abs, tag = 'smem constant byte address 0x4 - core index']
  #allocation1 [shape = 'u32[144,128]{1,0:T(1,128)}', space=vmem, size = 0x12000, scoped, tag = 'internal scratch']
  #allocation2 [shape = 'f32[64,256]{1,0:T(8,128)}', space=vmem, size = 0x10000, scoped, tag = 'scratch operand']
  %s0 = inlined_call_operand.hbm [shape: bf16[64,256], index: 0, kind: input, shape index: {}]
  %s1 = inlined_call_operand.hbm [shape: bf16[256,256], index: 1, kind: input, shape index: {}]
  %s2 = inlined_call_operand.hbm [shape: bf16[32,128], index: 2, kind: input, shape index: {}]
  %s3 = inlined_call_operand.vmem [shape: f32[1,256], index: 3, kind: input, shape index: {}]
  %s4 = inlined_call_operand.hbm [shape: bf16[64,128], index: 4, kind: input, shape index: {}]
  %s5 = inlined_call_operand.vmem [shape: f32[1,128], index: 5, kind: input, shape index: {}]
  %s6 = inlined_call_operand.hbm [shape: f32[8,128], index: 6, kind: output, shape index: {}]
  %s7 = sld [smem:[#allocation0]]
  $region50: #{tpu_custom_call.1} parent=0
    _
  %s9 = ssub.s32 1, %s7
  %s10 = scalar_select 0, %s9, %s7
  $region1: #{tpu_custom_call.1} parent=0
    #allocation3 [shape = 'u8[32768]{0}', space=vmem, size = 0x8000, scoped, tag = 'input window, operand 0, single buffered']
    #allocation4 [shape = 's32[1]{0}', space=sflag, size = 0x4, scoped, tag = 'scoped memory for tpu_custom_call.1']
    #allocation5 [shape = 's32[1]{0}', space=sflag, size = 0x4, scoped, tag = 'scoped memory for tpu_custom_call.1']
    #allocation6 [shape = 'u8[131072]{0}', space=vmem, size = 0x20000, scoped, tag = 'input window, operand 1, single buffered']
    #allocation7 [shape = 's32[1]{0}', space=sflag, size = 0x4, scoped, tag = 'scoped memory for tpu_custom_call.1']
    #allocation8 [shape = 'u8[8192]{0}', space=vmem, size = 0x2000, scoped, tag = 'input window, operand 2, single buffered']
    #allocation9 [shape = 'u8[16384]{0}', space=vmem, size = 0x4000, scoped, tag = 'input window, operand 4, single buffered']
    #allocation10 [shape = 's32[1]{0}', space=sflag, size = 0x4, scoped, tag = 'scoped memory for tpu_custom_call.1']
    #allocation11 [shape = 'u8[4096]{0}', space=vmem, size = 0x1000, scoped, tag = 'output window, operand 0, single buffered']
    %11 = vsyncpa [#allocation4], 0
    %12 = vsyncpa [#allocation7], 0
    %13 = vsyncpa [#allocation10], 0
    %14 = vsyncpa [#allocation5], 0
    // Predicated region
    $region2: #{tpu_custom_call.1} parent=1 // pred_check
      _
    $region3: #{tpu_custom_call.1} parent=1 // pred_check_branch
      %16 = sbr.rel (0) target = $region5
    $region4: #{tpu_custom_call.1} parent=1 // pred_region
      %s18 = ssub.s32 1024, 1024
      %19 = vsyncadd [#allocation4], %s18
      %s20 = sshll.u32 [#allocation3], 4
      %s21 = int_to_ptr.vmem [resolvable:$true] %s20
      %26 = dma.hbm_to_vmem [thread:$0]  %s0, 1024, %s21, [#allocation4], 128, 128, 8
    $region5: #{tpu_custom_call.1} parent=1 // pred_fallthru
      _
    // Predicated region
    $region6: #{tpu_custom_call.1} parent=1 // pred_check
      _
    $region7: #{tpu_custom_call.1} parent=1 // pred_check_branch
      %28 = sbr.rel (0) target = $region9
    $region8: #{tpu_custom_call.1} parent=1 // pred_region
      %s30 = ssub.s32 4096, 4096
      %31 = vsyncadd [#allocation7], %s30
      %s32 = sshll.u32 [#allocation6], 4
      %s33 = int_to_ptr.vmem [resolvable:$true] %s32
      %38 = dma.hbm_to_vmem [thread:$0]  %s1, 4096, %s33, [#allocation7], 128, 128, 8
    $region9: #{tpu_custom_call.1} parent=1 // pred_fallthru
      _
    // Predicated region
    $region10: #{tpu_custom_call.1} parent=1 // pred_check
      _
    $region11: #{tpu_custom_call.1} parent=1 // pred_check_branch
      %40 = sbr.rel (0) target = $region13
    $region12: #{tpu_custom_call.1} parent=1 // pred_region
      %s42 = ssub.s32 256, 256
      %43 = vsyncadd [#allocation7], %s42
      %s44 = sshll.u32 [#allocation8], 4
      %s45 = int_to_ptr.vmem [resolvable:$true] %s44
      %50 = dma.hbm_to_vmem [thread:$0]  %s2, 256, %s45, [#allocation7], 64, 64, 4
    $region13: #{tpu_custom_call.1} parent=1 // pred_fallthru
      _
    // Predicated region
    $region14: #{tpu_custom_call.1} parent=1 // pred_check
      _
    $region15: #{tpu_custom_call.1} parent=1 // pred_check_branch
      %52 = sbr.rel (0) target = $region17
    $region16: #{tpu_custom_call.1} parent=1 // pred_region
      _
    $region17: #{tpu_custom_call.1} parent=1 // pred_fallthru
      _
    // Predicated region
    $region18: #{tpu_custom_call.1} parent=1 // pred_check
      _
    $region19: #{tpu_custom_call.1} parent=1 // pred_check_branch
      %54 = sbr.rel (0) target = $region21
    $region20: #{tpu_custom_call.1} parent=1 // pred_region
      %s56 = ssub.s32 512, 512
      %57 = vsyncadd [#allocation10], %s56
      %s58 = sshll.u32 [#allocation9], 4
      %s59 = int_to_ptr.vmem [resolvable:$true] %s58
      %64 = dma.hbm_to_vmem [thread:$0]  %s4, 512, %s59, [#allocation10], 64, 64, 4
    $region21: #{tpu_custom_call.1} parent=1 // pred_fallthru
      _
    // Predicated region
    $region22: #{tpu_custom_call.1} parent=1 // pred_check
      _
    $region23: #{tpu_custom_call.1} parent=1 // pred_check_branch
      %66 = sbr.rel (0) target = $region25
    $region24: #{tpu_custom_call.1} parent=1 // pred_region
      _
    $region25: #{tpu_custom_call.1} parent=1 // pred_fallthru
      _
    // Predicated region
    $region26: #{tpu_custom_call.1} parent=1 // pred_check
      _
    $region27: #{tpu_custom_call.1} parent=1 // pred_check_branch
      %68 = sbr.rel (0) target = $region29
    $region28: #{tpu_custom_call.1} parent=1 // pred_region
      %69 = dma.done [#allocation4], 1024
    $region29: #{tpu_custom_call.1} parent=1 // pred_fallthru
      _
    // Predicated region
    $region30: #{tpu_custom_call.1} parent=1 // pred_check
      _
    $region31: #{tpu_custom_call.1} parent=1 // pred_check_branch
      %71 = sbr.rel (0) target = $region33
    $region32: #{tpu_custom_call.1} parent=1 // pred_region
      %72 = dma.done [#allocation7], 4096
    $region33: #{tpu_custom_call.1} parent=1 // pred_fallthru
      _
    // Predicated region
    $region34: #{tpu_custom_call.1} parent=1 // pred_check
      _
    $region35: #{tpu_custom_call.1} parent=1 // pred_check_branch
      %74 = sbr.rel (0) target = $region37
    $region36: #{tpu_custom_call.1} parent=1 // pred_region
      %75 = dma.done [#allocation7], 256
    $region37: #{tpu_custom_call.1} parent=1 // pred_fallthru
      _
    // Predicated region
    $region38: #{tpu_custom_call.1} parent=1 // pred_check
      _
    $region39: #{tpu_custom_call.1} parent=1 // pred_check_branch
      %77 = sbr.rel (0) target = $region41
    $region40: #{tpu_custom_call.1} parent=1 // pred_region
      %78 = dma.done [#allocation10], 512
    $region41: #{tpu_custom_call.1} parent=1 // pred_fallthru
      _
    %v80 = vld [vmem:[#allocation3] sm:$0xff]
    %v81 = vld [vmem:[#allocation3 + $0x8] sm:$0xff]
    %v82 = vld [vmem:[#allocation3 + $0x10] sm:$0xff]
    %v83 = vld [vmem:[#allocation3 + $0x18] sm:$0xff]
    %v84 = vld [vmem:[#allocation3 + $0x20] sm:$0xff]
    %v85 = vld [vmem:[#allocation3 + $0x28] sm:$0xff]
    %v86 = vld [vmem:[#allocation3 + $0x30] sm:$0xff]
    %v87 = vld [vmem:[#allocation3 + $0x38] sm:$0xff]
    %v88 = vld [vmem:[#allocation6] sm:$0xff]
    %v89 = vld [vmem:[#allocation6 + $0x8] sm:$0xff]
    %v90 = vld [vmem:[#allocation6 + $0x10] sm:$0xff]
    %v91 = vld [vmem:[#allocation6 + $0x18] sm:$0xff]
    %v92 = vld [vmem:[#allocation6 + $0x20] sm:$0xff]
    %v93 = vld [vmem:[#allocation6 + $0x28] sm:$0xff]
    %v94 = vld [vmem:[#allocation6 + $0x30] sm:$0xff]
    %v95 = vld [vmem:[#allocation6 + $0x38] sm:$0xff]
    %v96 = vld [vmem:[#allocation6 + $0x40] sm:$0xff]
    %v97 = vld [vmem:[#allocation6 + $0x48] sm:$0xff]
    %v98 = vld [vmem:[#allocation6 + $0x50] sm:$0xff]
    %v99 = vld [vmem:[#allocation6 + $0x58] sm:$0xff]
    %v100 = vld [vmem:[#allocation6 + $0x60] sm:$0xff]
    %v101 = vld [vmem:[#allocation6 + $0x68] sm:$0xff]
    %v102 = vld [vmem:[#allocation6 + $0x70] sm:$0xff]
    %v103 = vld [vmem:[#allocation6 + $0x78] sm:$0xff]
    %v104 = vld [vmem:[#allocation6 + $0x80] sm:$0xff]
    %v105 = vld [vmem:[#allocation6 + $0x88] sm:$0xff]
    %v106 = vld [vmem:[#allocation6 + $0x90] sm:$0xff]
    %v107 = vld [vmem:[#allocation6 + $0x98] sm:$0xff]
    %v108 = vld [vmem:[#allocation6 + $0xa0] sm:$0xff]
    %v109 = vld [vmem:[#allocation6 + $0xa8] sm:$0xff]
    %v110 = vld [vmem:[#allocation6 + $0xb0] sm:$0xff]
    %v111 = vld [vmem:[#allocation6 + $0xb8] sm:$0xff]
    %v112 = vld [vmem:[#allocation6 + $0xc0] sm:$0xff]
    %v113 = vld [vmem:[#allocation6 + $0xc8] sm:$0xff]
    %v114 = vld [vmem:[#allocation6 + $0xd0] sm:$0xff]
    %v115 = vld [vmem:[#allocation6 + $0xd8] sm:$0xff]
    %v116 = vld [vmem:[#allocation6 + $0xe0] sm:$0xff]
    %v117 = vld [vmem:[#allocation6 + $0xe8] sm:$0xff]
    %v118 = vld [vmem:[#allocation6 + $0xf0] sm:$0xff]
    %v119 = vld [vmem:[#allocation6 + $0xf8] sm:$0xff]
    %v120 = vld [vmem:[%s3] sm:$0x3]
    %v122 = vlaneseq
    %v123 = vshrl.u32 %v122, 7
    %v124 = vsub.s32 0, %v123
    %v125 = vrot.slane %v120, %v124
    %v126 = vlaneseq
    %v127 = vshrl.u32 %v126, 7
    %v128 = vsub.s32 1, %v127
    %v129 = vrot.slane %v120, %v128
    %v140 = vunpack.c.l.b16 %v80
    %v141 = vunpack.c.h.b16 %v80
    %v142 = vunpack.c.l.b16 %v81
    %v143 = vunpack.c.h.b16 %v81
    %v144 = vunpack.c.l.b16 %v82
    %v145 = vunpack.c.h.b16 %v82
    %v146 = vunpack.c.l.b16 %v83
    %v147 = vunpack.c.h.b16 %v83
    %v148 = vunpack.c.l.b16 %v84
    %v149 = vunpack.c.h.b16 %v84
    %v150 = vunpack.c.l.b16 %v85
    %v151 = vunpack.c.h.b16 %v85
    %v152 = vunpack.c.l.b16 %v86
    %v153 = vunpack.c.h.b16 %v86
    %v154 = vunpack.c.l.b16 %v87
    %v155 = vunpack.c.h.b16 %v87
    %v156 = vpack.c.b16 %v142, %v140
    %v157 = vpack.c.b16 %v143, %v141
    %v158 = vpack.c.b16 %v146, %v144
    %v159 = vpack.c.b16 %v147, %v145
    %v160 = vpack.c.b16 %v150, %v148
    %v161 = vpack.c.b16 %v151, %v149
    %v162 = vpack.c.b16 %v154, %v152
    %v163 = vpack.c.b16 %v155, %v153
    %v204 = vunpack.c.l.b16 %v88
    %v205 = vunpack.c.h.b16 %v88
    %v206 = vunpack.c.l.b16 %v89
    %v207 = vunpack.c.h.b16 %v89
    %v208 = vunpack.c.l.b16 %v90
    %v209 = vunpack.c.h.b16 %v90
    %v210 = vunpack.c.l.b16 %v91
    %v211 = vunpack.c.h.b16 %v91
    %v212 = vunpack.c.l.b16 %v92
    %v213 = vunpack.c.h.b16 %v92
    %v214 = vunpack.c.l.b16 %v93
    %v215 = vunpack.c.h.b16 %v93
    %v216 = vunpack.c.l.b16 %v94
    %v217 = vunpack.c.h.b16 %v94
    %v218 = vunpack.c.l.b16 %v95
    %v219 = vunpack.c.h.b16 %v95
    %v220 = vunpack.c.l.b16 %v96
    %v221 = vunpack.c.h.b16 %v96
    %v222 = vunpack.c.l.b16 %v97
    %v223 = vunpack.c.h.b16 %v97
    %v224 = vunpack.c.l.b16 %v98
    %v225 = vunpack.c.h.b16 %v98
    %v226 = vunpack.c.l.b16 %v99
    %v227 = vunpack.c.h.b16 %v99
    %v228 = vunpack.c.l.b16 %v100
    %v229 = vunpack.c.h.b16 %v100
    %v230 = vunpack.c.l.b16 %v101
    %v231 = vunpack.c.h.b16 %v101
    %v232 = vunpack.c.l.b16 %v102
    %v233 = vunpack.c.h.b16 %v102
    %v234 = vunpack.c.l.b16 %v103
    %v235 = vunpack.c.h.b16 %v103
    %v236 = vunpack.c.l.b16 %v104
    %v237 = vunpack.c.h.b16 %v104
    %v238 = vunpack.c.l.b16 %v105
    %v239 = vunpack.c.h.b16 %v105
    %v240 = vunpack.c.l.b16 %v106
    %v241 = vunpack.c.h.b16 %v106
    %v242 = vunpack.c.l.b16 %v107
    %v243 = vunpack.c.h.b16 %v107
    %v244 = vunpack.c.l.b16 %v108
    %v245 = vunpack.c.h.b16 %v108
    %v246 = vunpack.c.l.b16 %v109
    %v247 = vunpack.c.h.b16 %v109
    %v248 = vunpack.c.l.b16 %v110
    %v249 = vunpack.c.h.b16 %v110
    %v250 = vunpack.c.l.b16 %v111
    %v251 = vunpack.c.h.b16 %v111
    %v252 = vunpack.c.l.b16 %v112
    %v253 = vunpack.c.h.b16 %v112
    %v254 = vunpack.c.l.b16 %v113
    %v255 = vunpack.c.h.b16 %v113
    %v256 = vunpack.c.l.b16 %v114
    %v257 = vunpack.c.h.b16 %v114
    %v258 = vunpack.c.l.b16 %v115
    %v259 = vunpack.c.h.b16 %v115
    %v260 = vunpack.c.l.b16 %v116
    %v261 = vunpack.c.h.b16 %v116
    %v262 = vunpack.c.l.b16 %v117
    %v263 = vunpack.c.h.b16 %v117
    %v264 = vunpack.c.l.b16 %v118
    %v265 = vunpack.c.h.b16 %v118
    %v266 = vunpack.c.l.b16 %v119
    %v267 = vunpack.c.h.b16 %v119
    %v268 = vpack.c.b16 %v206, %v204
    %v269 = vpack.c.b16 %v207, %v205
    %v270 = vpack.c.b16 %v210, %v208
    %v271 = vpack.c.b16 %v211, %v209
    %v272 = vpack.c.b16 %v214, %v212
    %v273 = vpack.c.b16 %v215, %v213
    %v274 = vpack.c.b16 %v218, %v216
    %v275 = vpack.c.b16 %v219, %v217
    %v276 = vpack.c.b16 %v222, %v220
    %v277 = vpack.c.b16 %v223, %v221
    %v278 = vpack.c.b16 %v226, %v224
    %v279 = vpack.c.b16 %v227, %v225
    %v280 = vpack.c.b16 %v230, %v228
    %v281 = vpack.c.b16 %v231, %v229
    %v282 = vpack.c.b16 %v234, %v232
    %v283 = vpack.c.b16 %v235, %v233
    %v284 = vpack.c.b16 %v238, %v236
    %v285 = vpack.c.b16 %v239, %v237
    %v286 = vpack.c.b16 %v242, %v240
    %v287 = vpack.c.b16 %v243, %v241
    %v288 = vpack.c.b16 %v246, %v244
    %v289 = vpack.c.b16 %v247, %v245
    %v290 = vpack.c.b16 %v250, %v248
    %v291 = vpack.c.b16 %v251, %v249
    %v292 = vpack.c.b16 %v254, %v252
    %v293 = vpack.c.b16 %v255, %v253
    %v294 = vpack.c.b16 %v258, %v256
    %v295 = vpack.c.b16 %v259, %v257
    %v296 = vpack.c.b16 %v262, %v260
    %v297 = vpack.c.b16 %v263, %v261
    %v298 = vpack.c.b16 %v266, %v264
    %v299 = vpack.c.b16 %v267, %v265
    %332 = vmatprep.subr.bf16.mxu0 %v269
    %333 = vmatpush1.bf16.msra.mxu0 %v268
    %334 = vmatprep.subr.bf16.mxu0 %v271
    %335 = vmatpush1.bf16.msra.mxu0 %v270
    %336 = vmatprep.subr.bf16.mxu0 %v273
    %337 = vmatpush1.bf16.msra.mxu0 %v272
    %338 = vmatprep.subr.bf16.mxu0 %v275
    %339 = vmatpush1.bf16.msra.mxu0 %v274
    %340 = vmatprep.subr.bf16.mxu0 %v277
    %341 = vmatpush1.bf16.msra.mxu0 %v276
    %342 = vmatprep.subr.bf16.mxu0 %v279
    %343 = vmatpush1.bf16.msra.mxu0 %v278
    %344 = vmatprep.subr.bf16.mxu0 %v281
    %345 = vmatpush1.bf16.msra.mxu0 %v280
    %346 = vmatprep.subr.bf16.mxu0 %v283
    %347 = vmatpush1.bf16.msra.mxu0 %v282
    %348 = vmatprep.subr.bf16.mxu0 %v285
    %349 = vmatpush1.bf16.msra.mxu0 %v284
    %350 = vmatprep.subr.bf16.mxu0 %v287
    %351 = vmatpush1.bf16.msra.mxu0 %v286
    %352 = vmatprep.subr.bf16.mxu0 %v289
    %353 = vmatpush1.bf16.msra.mxu0 %v288
    %354 = vmatprep.subr.bf16.mxu0 %v291
    %355 = vmatpush1.bf16.msra.mxu0 %v290
    %356 = vmatprep.subr.bf16.mxu0 %v293
    %357 = vmatpush1.bf16.msra.mxu0 %v292
    %358 = vmatprep.subr.bf16.mxu0 %v295
    %359 = vmatpush1.bf16.msra.mxu0 %v294
    %360 = vmatprep.subr.bf16.mxu0 %v297
    %361 = vmatpush1.bf16.msra.mxu0 %v296
    %362 = vmatprep.subr.bf16.mxu0 %v299
    %363 = vmatpush1.bf16.msra.mxu0 %v298
    %364 = vmatprep.mubr.bf16.mxu0 %v157
    %365 = vmatmul.mubr.bf16.gmra.mrb[0].mxu0 %v156
    %v366 = vpop.f32.mrb[0].mxu0
    %v367 = vadd.f32 %v125, %v366
    %v368 = vpop.f32.mrb[0].mxu0
    %v369 = vadd.f32 %v129, %v368
    %v370 = vpop.f32.mrb[0].mxu0
    %v371 = vadd.f32 %v125, %v370
    %v372 = vpop.f32.mrb[0].mxu0
    %v373 = vadd.f32 %v129, %v372
    %374 = vmatprep.mubr.bf16.mxu0 %v159
    %375 = vmatmul.mubr.bf16.gmra.mrb[0].mxu0 %v158
    %v376 = vpop.f32.mrb[0].mxu0
    %v377 = vadd.f32 %v125, %v376
    %v378 = vpop.f32.mrb[0].mxu0
    %v379 = vadd.f32 %v129, %v378
    %v380 = vpop.f32.mrb[0].mxu0
    %v381 = vadd.f32 %v125, %v380
    %v382 = vpop.f32.mrb[0].mxu0
    %v383 = vadd.f32 %v129, %v382
    %384 = vmatprep.mubr.bf16.mxu0 %v161
    %385 = vmatmul.mubr.bf16.gmra.mrb[0].mxu0 %v160
    %v386 = vpop.f32.mrb[0].mxu0
    %v387 = vadd.f32 %v125, %v386
    %v388 = vpop.f32.mrb[0].mxu0
    %v389 = vadd.f32 %v129, %v388
    %v390 = vpop.f32.mrb[0].mxu0
    %v391 = vadd.f32 %v125, %v390
    %v392 = vpop.f32.mrb[0].mxu0
    %v393 = vadd.f32 %v129, %v392
    %394 = vmatprep.mubr.bf16.mxu0 %v163
    %395 = vmatmul.mubr.bf16.gmra.mrb[0].mxu0 %v162
    %v396 = vpop.f32.mrb[0].mxu0
    %v397 = vadd.f32 %v125, %v396
    %v398 = vpop.f32.mrb[0].mxu0
    %v399 = vadd.f32 %v129, %v398
    %v400 = vpop.f32.mrb[0].mxu0
    %v401 = vadd.f32 %v125, %v400
    %v402 = vpop.f32.mrb[0].mxu0
    %v403 = vadd.f32 %v129, %v402
    %404 = vdwg.mxu0
    %405 = vst [vmem:[#allocation2] sm:$0xff] %v367
    %406 = vst [vmem:[#allocation2 + $0x8] sm:$0xff] %v369
    %407 = vst [vmem:[#allocation2 + $0x10] sm:$0xff] %v371
    %408 = vst [vmem:[#allocation2 + $0x18] sm:$0xff] %v373
    %409 = vst [vmem:[#allocation2 + $0x20] sm:$0xff] %v377
    %410 = vst [vmem:[#allocation2 + $0x28] sm:$0xff] %v379
    %411 = vst [vmem:[#allocation2 + $0x30] sm:$0xff] %v381
    %412 = vst [vmem:[#allocation2 + $0x38] sm:$0xff] %v383
    %413 = vst [vmem:[#allocation2 + $0x40] sm:$0xff] %v387
    %414 = vst [vmem:[#allocation2 + $0x48] sm:$0xff] %v389
    %415 = vst [vmem:[#allocation2 + $0x50] sm:$0xff] %v391
    %416 = vst [vmem:[#allocation2 + $0x58] sm:$0xff] %v393
    %417 = vst [vmem:[#allocation2 + $0x60] sm:$0xff] %v397
    %418 = vst [vmem:[#allocation2 + $0x68] sm:$0xff] %v399
    %419 = vst [vmem:[#allocation2 + $0x70] sm:$0xff] %v401
    %420 = vst [vmem:[#allocation2 + $0x78] sm:$0xff] %v403
    %v421 = vld [vmem:[#allocation2 + $0x78] sm:$0xff]
    %v422 = vxor.u32 %v421, 2147483648
    %v423 = vmul.f32 %v422, 1.442695
    %v424 = vpow.pop %v423
    %v425 = vadd.f32 %v424, 1.0
    %v426 = vrcp.pop %v425
    %v427 = vmul.f32 1.0, %v426
    %v428 = vmul.f32 %v427, 2.0
    %v429 = vsub.f32 %v428, 1.0
    %431 = vrot.lane.b32.xlu0 %v429, 64
    %v432 = vpop.permute.xlu0 %431
    %v434 = vmul.f32 %v427, %v432
    %v435 = vtanh.pop %v434
    %437 = vrot.lane.b32.xlu0 %v435, 96
    %v438 = vpop.permute.xlu0 %437
    %v440 = vmul.f32 %v427, %v438
    %v441 = vld [vmem:[#allocation8] sm:$0xf]
    %v442 = vld [vmem:[#allocation8 + $0x4] sm:$0xf]
    %v443 = vld [vmem:[#allocation8 + $0x8] sm:$0xf]
    %v444 = vld [vmem:[#allocation8 + $0xc] sm:$0xf]
    %s445 = smul.u32 0, 2
    %s446 = smul.addr %s445, 8
    %s447 = scalar_lea.vmem [#allocation2], %s446
    %v448 = vld [vmem:[%s447] sm:$0xff]
    %v453 = vunpack.c.l.b16 %v441
    %v454 = vunpack.c.l.b16 %v442
    %v455 = vunpack.c.l.b16 %v443
    %v456 = vunpack.c.l.b16 %v444
    %v457 = vpack.c.b16 %v454, %v453
    %v458 = vpack.c.b16 %v456, %v455
    %vm461 = vcmask 261120
    %v463 = vsel %vm461, 0, 0
    %465 = vmatprep.subr.bf16.mxu0 0
    %466 = vmatpush1.bf16.msra.mxu0 %v457
    %467 = vmatprep.subr.bf16.mxu0 0
    %468 = vmatpush1.bf16.msra.mxu0 %v458
    %469 = vmatprep.subr.bf16.mxu0 0
    %470 = vmatpush1.bf16.msra.mxu0 0
    %471 = vmatprep.subr.bf16.mxu0 0
    %472 = vmatpush1.bf16.msra.mxu0 0
    %473 = vmatprep.subr.bf16.mxu0 0
    %474 = vmatpush1.bf16.msra.mxu0 0
    %475 = vmatprep.subr.bf16.mxu0 0
    %476 = vmatpush1.bf16.msra.mxu0 0
    %477 = vmatprep.subr.bf16.mxu0 0
    %478 = vmatpush1.bf16.msra.mxu0 0
    %479 = vmatprep.subr.bf16.mxu0 0
    %480 = vmatpush1.bf16.msra.mxu0 0
    %481 = vmatprep.subr.bf16.mxu0 0
    %482 = vmatpush1.bf16.msra.mxu0 0
    %483 = vmatprep.subr.bf16.mxu0 0
    %484 = vmatpush1.bf16.msra.mxu0 0
    %485 = vmatprep.subr.bf16.mxu0 0
    %486 = vmatpush1.bf16.msra.mxu0 0
    %487 = vmatprep.subr.bf16.mxu0 0
    %488 = vmatpush1.bf16.msra.mxu0 0
    %489 = vmatprep.subr.bf16.mxu0 0
    %490 = vmatpush1.bf16.msra.mxu0 0
    %491 = vmatprep.subr.bf16.mxu0 0
    %492 = vmatpush1.bf16.msra.mxu0 0
    %493 = vmatprep.subr.bf16.mxu0 0
    %494 = vmatpush1.bf16.msra.mxu0 0
    %495 = vmatprep.subr.bf16.mxu0 0
    %496 = vmatpush1.bf16.msra.mxu0 0
    %497 = vmatprep.mubr.bf16.mxu0 0
    %498 = vmatmul.mubr.bf16.gmra.mrb[0].mxu0 %v463
    %v499 = vpop.f32.mrb[0].mxu0
    %v500 = vadd.f32 0.0, %v499
    %v501 = vpop.f32.mrb[0].mxu0
    %v502 = vpop.f32.mrb[0].mxu0
    %v503 = vpop.f32.mrb[0].mxu0
    %504 = vdwg.mxu0
    %v505 = vadd.f32 %v448, %v500
    %v506 = vxor.u32 %v505, 2147483648
    %v507 = vmul.f32 %v506, 1.442695
    %v508 = vpow.pop %v507
    %v509 = vadd.f32 %v508, 1.0
    %v510 = vrcp.pop %v509
    %v511 = vmul.f32 1.0, %v510
    %v512 = vmul.f32 %v511, 2.0
    %v513 = vsub.f32 %v512, 1.0
    %v514 = vmul.f32 %v511, 0.0
    %516 = vrot.lane.b32.xlu0 %v513, 64
    %v517 = vpop.permute.xlu0 %516
    %v519 = vmul.f32 %v511, %v517
    %521 = vrot.lane.b32.xlu0 %v519, 32
    %v522 = vpop.permute.xlu0 %521
    %v524 = vadd.f32 %v514, %v522
    %v525 = vtanh.pop %v524
    %527 = vrot.lane.b32.xlu0 %v525, 64
    %v528 = vpop.permute.xlu0 %527
    %v530 = vmul.f32 %v511, %v528
    %s531 = smul.u32 1, 2
    %s532 = smul.addr %s531, 8
    %s533 = scalar_lea.vmem [#allocation2], %s532
    %v534 = vld [vmem:[%s533] sm:$0xff]
    %v535 = vpack.c.bf16 %v530, %v530
    %537 = vrot.lane.b32.xlu0 %v535, 32
    %v538 = vpop.permute.xlu0 %537
    %v540 = vsel %vm461, %v538, 0
    %542 = vmatprep.subr.bf16.mxu0 0
    %543 = vmatpush1.bf16.msra.mxu0 %v457
    %544 = vmatprep.subr.bf16.mxu0 0
    %545 = vmatpush1.bf16.msra.mxu0 %v458
    %546 = vmatprep.subr.bf16.mxu0 0
    %547 = vmatpush1.bf16.msra.mxu0 0
    %548 = vmatprep.subr.bf16.mxu0 0
    %549 = vmatpush1.bf16.msra.mxu0 0
    %550 = vmatprep.subr.bf16.mxu0 0
    %551 = vmatpush1.bf16.msra.mxu0 0
    %552 = vmatprep.subr.bf16.mxu0 0
    %553 = vmatpush1.bf16.msra.mxu0 0
    %554 = vmatprep.subr.bf16.mxu0 0
    %555 = vmatpush1.bf16.msra.mxu0 0
    %556 = vmatprep.subr.bf16.mxu0 0
    %557 = vmatpush1.bf16.msra.mxu0 0
    %558 = vmatprep.subr.bf16.mxu0 0
    %559 = vmatpush1.bf16.msra.mxu0 0
    %560 = vmatprep.subr.bf16.mxu0 0
    %561 = vmatpush1.bf16.msra.mxu0 0
    %562 = vmatprep.subr.bf16.mxu0 0
    %563 = vmatpush1.bf16.msra.mxu0 0
    %564 = vmatprep.subr.bf16.mxu0 0
    %565 = vmatpush1.bf16.msra.mxu0 0
    %566 = vmatprep.subr.bf16.mxu0 0
    %567 = vmatpush1.bf16.msra.mxu0 0
    %568 = vmatprep.subr.bf16.mxu0 0
    %569 = vmatpush1.bf16.msra.mxu0 0
    %570 = vmatprep.subr.bf16.mxu0 0
    %571 = vmatpush1.bf16.msra.mxu0 0
    %572 = vmatprep.subr.bf16.mxu0 0
    %573 = vmatpush1.bf16.msra.mxu0 0
    %574 = vmatprep.mubr.bf16.mxu0 0
    %575 = vmatmul.mubr.bf16.gmra.mrb[0].mxu0 %v540
    %v576 = vpop.f32.mrb[0].mxu0
    %v577 = vadd.f32 0.0, %v576
    %v578 = vpop.f32.mrb[0].mxu0
    %v579 = vpop.f32.mrb[0].mxu0
    %v580 = vpop.f32.mrb[0].mxu0
    %581 = vdwg.mxu0
    %v582 = vadd.f32 %v534, %v577
    %v583 = vxor.u32 %v582, 2147483648
    %v584 = vmul.f32 %v583, 1.442695
    %v585 = vpow.pop %v584
    %v586 = vadd.f32 %v585, 1.0
    %v587 = vrcp.pop %v586
    %v588 = vmul.f32 1.0, %v587
    %v589 = vmul.f32 %v588, 2.0
    %v590 = vsub.f32 %v589, 1.0
    %v591 = vmul.f32 %v588, %v524
    %593 = vrot.lane.b32.xlu0 %v590, 64
    %v594 = vpop.permute.xlu0 %593
    %v596 = vmul.f32 %v588, %v594
    %598 = vrot.lane.b32.xlu0 %v596, 32
    %v599 = vpop.permute.xlu0 %598
    %v601 = vadd.f32 %v591, %v599
    %v602 = vtanh.pop %v601
    %604 = vrot.lane.b32.xlu0 %v602, 64
    %v605 = vpop.permute.xlu0 %604
    %v607 = vmul.f32 %v588, %v605
    %s608 = smul.u32 2, 2
    %s609 = smul.addr %s608, 8
    %s610 = scalar_lea.vmem [#allocation2], %s609
    %v611 = vld [vmem:[%s610] sm:$0xff]
    %v612 = vpack.c.bf16 %v607, %v607
    %614 = vrot.lane.b32.xlu0 %v612, 32
    %v615 = vpop.permute.xlu0 %614
    %v617 = vsel %vm461, %v615, 0
    %619 = vmatprep.subr.bf16.mxu0 0
    %620 = vmatpush1.bf16.msra.mxu0 %v457
    %621 = vmatprep.subr.bf16.mxu0 0
    %622 = vmatpush1.bf16.msra.mxu0 %v458
    %623 = vmatprep.subr.bf16.mxu0 0
    %624 = vmatpush1.bf16.msra.mxu0 0
    %625 = vmatprep.subr.bf16.mxu0 0
    %626 = vmatpush1.bf16.msra.mxu0 0
    %627 = vmatprep.subr.bf16.mxu0 0
    %628 = vmatpush1.bf16.msra.mxu0 0
    %629 = vmatprep.subr.bf16.mxu0 0
    %630 = vmatpush1.bf16.msra.mxu0 0
    %631 = vmatprep.subr.bf16.mxu0 0
    %632 = vmatpush1.bf16.msra.mxu0 0
    %633 = vmatprep.subr.bf16.mxu0 0
    %634 = vmatpush1.bf16.msra.mxu0 0
    %635 = vmatprep.subr.bf16.mxu0 0
    %636 = vmatpush1.bf16.msra.mxu0 0
    %637 = vmatprep.subr.bf16.mxu0 0
    %638 = vmatpush1.bf16.msra.mxu0 0
    %639 = vmatprep.subr.bf16.mxu0 0
    %640 = vmatpush1.bf16.msra.mxu0 0
    %641 = vmatprep.subr.bf16.mxu0 0
    %642 = vmatpush1.bf16.msra.mxu0 0
    %643 = vmatprep.subr.bf16.mxu0 0
    %644 = vmatpush1.bf16.msra.mxu0 0
    %645 = vmatprep.subr.bf16.mxu0 0
    %646 = vmatpush1.bf16.msra.mxu0 0
    %647 = vmatprep.subr.bf16.mxu0 0
    %648 = vmatpush1.bf16.msra.mxu0 0
    %649 = vmatprep.subr.bf16.mxu0 0
    %650 = vmatpush1.bf16.msra.mxu0 0
    %651 = vmatprep.mubr.bf16.mxu0 0
    %652 = vmatmul.mubr.bf16.gmra.mrb[0].mxu0 %v617
    %v653 = vpop.f32.mrb[0].mxu0
    %v654 = vadd.f32 0.0, %v653
    %v655 = vpop.f32.mrb[0].mxu0
    %v656 = vpop.f32.mrb[0].mxu0
    %v657 = vpop.f32.mrb[0].mxu0
    %658 = vdwg.mxu0
    %v659 = vadd.f32 %v611, %v654
    %v660 = vxor.u32 %v659, 2147483648
    %v661 = vmul.f32 %v660, 1.442695
    %v662 = vpow.pop %v661
    %v663 = vadd.f32 %v662, 1.0
    %v664 = vrcp.pop %v663
    %v665 = vmul.f32 1.0, %v664
    %v666 = vmul.f32 %v665, 2.0
    %v667 = vsub.f32 %v666, 1.0
    %v668 = vmul.f32 %v665, %v601
    %670 = vrot.lane.b32.xlu0 %v667, 64
    %v671 = vpop.permute.xlu0 %670
    %v673 = vmul.f32 %v665, %v671
    %675 = vrot.lane.b32.xlu0 %v673, 32
    %v676 = vpop.permute.xlu0 %675
    %v678 = vadd.f32 %v668, %v676
    %v679 = vtanh.pop %v678
    %681 = vrot.lane.b32.xlu0 %v679, 64
    %v682 = vpop.permute.xlu0 %681
    %v684 = vmul.f32 %v665, %v682
    %s685 = smul.u32 3, 2
    %s686 = smul.addr %s685, 8
    %s687 = scalar_lea.vmem [#allocation2], %s686
    %v688 = vld [vmem:[%s687] sm:$0xff]
    %v689 = vpack.c.bf16 %v684, %v684
    %691 = vrot.lane.b32.xlu0 %v689, 32
    %v692 = vpop.permute.xlu0 %691
    %v694 = vsel %vm461, %v692, 0
    %696 = vmatprep.subr.bf16.mxu0 0
    %697 = vmatpush1.bf16.msra.mxu0 %v457
    %698 = vmatprep.subr.bf16.mxu0 0
    %699 = vmatpush1.bf16.msra.mxu0 %v458
    %700 = vmatprep.subr.bf16.mxu0 0
    %701 = vmatpush1.bf16.msra.mxu0 0
    %702 = vmatprep.subr.bf16.mxu0 0
    %703 = vmatpush1.bf16.msra.mxu0 0
    %704 = vmatprep.subr.bf16.mxu0 0
    %705 = vmatpush1.bf16.msra.mxu0 0
    %706 = vmatprep.subr.bf16.mxu0 0
    %707 = vmatpush1.bf16.msra.mxu0 0
    %708 = vmatprep.subr.bf16.mxu0 0
    %709 = vmatpush1.bf16.msra.mxu0 0
    %710 = vmatprep.subr.bf16.mxu0 0
    %711 = vmatpush1.bf16.msra.mxu0 0
    %712 = vmatprep.subr.bf16.mxu0 0
    %713 = vmatpush1.bf16.msra.mxu0 0
    %714 = vmatprep.subr.bf16.mxu0 0
    %715 = vmatpush1.bf16.msra.mxu0 0
    %716 = vmatprep.subr.bf16.mxu0 0
    %717 = vmatpush1.bf16.msra.mxu0 0
    %718 = vmatprep.subr.bf16.mxu0 0
    %719 = vmatpush1.bf16.msra.mxu0 0
    %720 = vmatprep.subr.bf16.mxu0 0
    %721 = vmatpush1.bf16.msra.mxu0 0
    %722 = vmatprep.subr.bf16.mxu0 0
    %723 = vmatpush1.bf16.msra.mxu0 0
    %724 = vmatprep.subr.bf16.mxu0 0
    %725 = vmatpush1.bf16.msra.mxu0 0
    %726 = vmatprep.subr.bf16.mxu0 0
    %727 = vmatpush1.bf16.msra.mxu0 0
    %728 = vmatprep.mubr.bf16.mxu0 0
    %729 = vmatmul.mubr.bf16.gmra.mrb[0].mxu0 %v694
    %v730 = vpop.f32.mrb[0].mxu0
    %v731 = vadd.f32 0.0, %v730
    %v732 = vpop.f32.mrb[0].mxu0
    %v733 = vpop.f32.mrb[0].mxu0
    %v734 = vpop.f32.mrb[0].mxu0
    %735 = vdwg.mxu0
    %v736 = vadd.f32 %v688, %v731
    %v737 = vxor.u32 %v736, 2147483648
    %v738 = vmul.f32 %v737, 1.442695
    %v739 = vpow.pop %v738
    %v740 = vadd.f32 %v739, 1.0
    %v741 = vrcp.pop %v740
    %v742 = vmul.f32 1.0, %v741
    %v743 = vmul.f32 %v742, 2.0
    %v744 = vsub.f32 %v743, 1.0
    %v745 = vmul.f32 %v742, %v678
    %747 = vrot.lane.b32.xlu0 %v744, 64
    %v748 = vpop.permute.xlu0 %747
    %v750 = vmul.f32 %v742, %v748
    %752 = vrot.lane.b32.xlu0 %v750, 32
    %v753 = vpop.permute.xlu0 %752
    %v755 = vadd.f32 %v745, %v753
    %v756 = vtanh.pop %v755
    %758 = vrot.lane.b32.xlu0 %v756, 64
    %v759 = vpop.permute.xlu0 %758
    %v761 = vmul.f32 %v742, %v759
    %s762 = smul.u32 4, 2
    %s763 = smul.addr %s762, 8
    %s764 = scalar_lea.vmem [#allocation2], %s763
    %v765 = vld [vmem:[%s764] sm:$0xff]
    %v766 = vpack.c.bf16 %v761, %v761
    %768 = vrot.lane.b32.xlu0 %v766, 32
    %v769 = vpop.permute.xlu0 %768
    %v771 = vsel %vm461, %v769, 0
    %773 = vmatprep.subr.bf16.mxu0 0
    %774 = vmatpush1.bf16.msra.mxu0 %v457
    %775 = vmatprep.subr.bf16.mxu0 0
    %776 = vmatpush1.bf16.msra.mxu0 %v458
    %777 = vmatprep.subr.bf16.mxu0 0
    %778 = vmatpush1.bf16.msra.mxu0 0
    %779 = vmatprep.subr.bf16.mxu0 0
    %780 = vmatpush1.bf16.msra.mxu0 0
    %781 = vmatprep.subr.bf16.mxu0 0
    %782 = vmatpush1.bf16.msra.mxu0 0
    %783 = vmatprep.subr.bf16.mxu0 0
    %784 = vmatpush1.bf16.msra.mxu0 0
    %785 = vmatprep.subr.bf16.mxu0 0
    %786 = vmatpush1.bf16.msra.mxu0 0
    %787 = vmatprep.subr.bf16.mxu0 0
    %788 = vmatpush1.bf16.msra.mxu0 0
    %789 = vmatprep.subr.bf16.mxu0 0
    %790 = vmatpush1.bf16.msra.mxu0 0
    %791 = vmatprep.subr.bf16.mxu0 0
    %792 = vmatpush1.bf16.msra.mxu0 0
    %793 = vmatprep.subr.bf16.mxu0 0
    %794 = vmatpush1.bf16.msra.mxu0 0
    %795 = vmatprep.subr.bf16.mxu0 0
    %796 = vmatpush1.bf16.msra.mxu0 0
    %797 = vmatprep.subr.bf16.mxu0 0
    %798 = vmatpush1.bf16.msra.mxu0 0
    %799 = vmatprep.subr.bf16.mxu0 0
    %800 = vmatpush1.bf16.msra.mxu0 0
    %801 = vmatprep.subr.bf16.mxu0 0
    %802 = vmatpush1.bf16.msra.mxu0 0
    %803 = vmatprep.subr.bf16.mxu0 0
    %804 = vmatpush1.bf16.msra.mxu0 0
    %805 = vmatprep.mubr.bf16.mxu0 0
    %806 = vmatmul.mubr.bf16.gmra.mrb[0].mxu0 %v771
    %v807 = vpop.f32.mrb[0].mxu0
    %v808 = vadd.f32 0.0, %v807
    %v809 = vpop.f32.mrb[0].mxu0
    %v810 = vpop.f32.mrb[0].mxu0
    %v811 = vpop.f32.mrb[0].mxu0
    %812 = vdwg.mxu0
    %v813 = vadd.f32 %v765, %v808
    %v814 = vxor.u32 %v813, 2147483648
    %v815 = vmul.f32 %v814, 1.442695
    %v816 = vpow.pop %v815
    %v817 = vadd.f32 %v816, 1.0
    %v818 = vrcp.pop %v817
    %v819 = vmul.f32 1.0, %v818
    %v820 = vmul.f32 %v819, 2.0
    %v821 = vsub.f32 %v820, 1.0
    %v822 = vmul.f32 %v819, %v755
    %824 = vrot.lane.b32.xlu0 %v821, 64
    %v825 = vpop.permute.xlu0 %824
    %v827 = vmul.f32 %v819, %v825
    %829 = vrot.lane.b32.xlu0 %v827, 32
    %v830 = vpop.permute.xlu0 %829
    %v832 = vadd.f32 %v822, %v830
    %v833 = vtanh.pop %v832
    %835 = vrot.lane.b32.xlu0 %v833, 64
    %v836 = vpop.permute.xlu0 %835
    %v838 = vmul.f32 %v819, %v836
    %s839 = smul.u32 5, 2
    %s840 = smul.addr %s839, 8
    %s841 = scalar_lea.vmem [#allocation2], %s840
    %v842 = vld [vmem:[%s841] sm:$0xff]
    %v843 = vpack.c.bf16 %v838, %v838
    %845 = vrot.lane.b32.xlu0 %v843, 32
    %v846 = vpop.permute.xlu0 %845
    %v848 = vsel %vm461, %v846, 0
    %850 = vmatprep.subr.bf16.mxu0 0
    %851 = vmatpush1.bf16.msra.mxu0 %v457
    %852 = vmatprep.subr.bf16.mxu0 0
    %853 = vmatpush1.bf16.msra.mxu0 %v458
    %854 = vmatprep.subr.bf16.mxu0 0
    %855 = vmatpush1.bf16.msra.mxu0 0
    %856 = vmatprep.subr.bf16.mxu0 0
    %857 = vmatpush1.bf16.msra.mxu0 0
    %858 = vmatprep.subr.bf16.mxu0 0
    %859 = vmatpush1.bf16.msra.mxu0 0
    %860 = vmatprep.subr.bf16.mxu0 0
    %861 = vmatpush1.bf16.msra.mxu0 0
    %862 = vmatprep.subr.bf16.mxu0 0
    %863 = vmatpush1.bf16.msra.mxu0 0
    %864 = vmatprep.subr.bf16.mxu0 0
    %865 = vmatpush1.bf16.msra.mxu0 0
    %866 = vmatprep.subr.bf16.mxu0 0
    %867 = vmatpush1.bf16.msra.mxu0 0
    %868 = vmatprep.subr.bf16.mxu0 0
    %869 = vmatpush1.bf16.msra.mxu0 0
    %870 = vmatprep.subr.bf16.mxu0 0
    %871 = vmatpush1.bf16.msra.mxu0 0
    %872 = vmatprep.subr.bf16.mxu0 0
    %873 = vmatpush1.bf16.msra.mxu0 0
    %874 = vmatprep.subr.bf16.mxu0 0
    %875 = vmatpush1.bf16.msra.mxu0 0
    %876 = vmatprep.subr.bf16.mxu0 0
    %877 = vmatpush1.bf16.msra.mxu0 0
    %878 = vmatprep.subr.bf16.mxu0 0
    %879 = vmatpush1.bf16.msra.mxu0 0
    %880 = vmatprep.subr.bf16.mxu0 0
    %881 = vmatpush1.bf16.msra.mxu0 0
    %882 = vmatprep.mubr.bf16.mxu0 0
    %883 = vmatmul.mubr.bf16.gmra.mrb[0].mxu0 %v848
    %v884 = vpop.f32.mrb[0].mxu0
    %v885 = vadd.f32 0.0, %v884
    %v886 = vpop.f32.mrb[0].mxu0
    %v887 = vpop.f32.mrb[0].mxu0
    %v888 = vpop.f32.mrb[0].mxu0
    %889 = vdwg.mxu0
    %v890 = vadd.f32 %v842, %v885
    %v891 = vxor.u32 %v890, 2147483648
    %v892 = vmul.f32 %v891, 1.442695
    %v893 = vpow.pop %v892
    %v894 = vadd.f32 %v893, 1.0
    %v895 = vrcp.pop %v894
    %v896 = vmul.f32 1.0, %v895
    %v897 = vmul.f32 %v896, 2.0
    %v898 = vsub.f32 %v897, 1.0
    %v899 = vmul.f32 %v896, %v832
    %901 = vrot.lane.b32.xlu0 %v898, 64
    %v902 = vpop.permute.xlu0 %901
    %v904 = vmul.f32 %v896, %v902
    %906 = vrot.lane.b32.xlu0 %v904, 32
    %v907 = vpop.permute.xlu0 %906
    %v909 = vadd.f32 %v899, %v907
    %v910 = vtanh.pop %v909
    %912 = vrot.lane.b32.xlu0 %v910, 64
    %v913 = vpop.permute.xlu0 %912
    %v915 = vmul.f32 %v896, %v913
    %s916 = smul.u32 6, 2
    %s917 = smul.addr %s916, 8
    %s918 = scalar_lea.vmem [#allocation2], %s917
    %v919 = vld [vmem:[%s918] sm:$0xff]
    %v920 = vpack.c.bf16 %v915, %v915
    %922 = vrot.lane.b32.xlu0 %v920, 32
    %v923 = vpop.permute.xlu0 %922
    %v925 = vsel %vm461, %v923, 0
    %927 = vmatprep.subr.bf16.mxu0 0
    %928 = vmatpush1.bf16.msra.mxu0 %v457
    %929 = vmatprep.subr.bf16.mxu0 0
    %930 = vmatpush1.bf16.msra.mxu0 %v458
    %931 = vmatprep.subr.bf16.mxu0 0
    %932 = vmatpush1.bf16.msra.mxu0 0
    %933 = vmatprep.subr.bf16.mxu0 0
    %934 = vmatpush1.bf16.msra.mxu0 0
    %935 = vmatprep.subr.bf16.mxu0 0
    %936 = vmatpush1.bf16.msra.mxu0 0
    %937 = vmatprep.subr.bf16.mxu0 0
    %938 = vmatpush1.bf16.msra.mxu0 0
    %939 = vmatprep.subr.bf16.mxu0 0
    %940 = vmatpush1.bf16.msra.mxu0 0
    %941 = vmatprep.subr.bf16.mxu0 0
    %942 = vmatpush1.bf16.msra.mxu0 0
    %943 = vmatprep.subr.bf16.mxu0 0
    %944 = vmatpush1.bf16.msra.mxu0 0
    %945 = vmatprep.subr.bf16.mxu0 0
    %946 = vmatpush1.bf16.msra.mxu0 0
    %947 = vmatprep.subr.bf16.mxu0 0
    %948 = vmatpush1.bf16.msra.mxu0 0
    %949 = vmatprep.subr.bf16.mxu0 0
    %950 = vmatpush1.bf16.msra.mxu0 0
    %951 = vmatprep.subr.bf16.mxu0 0
    %952 = vmatpush1.bf16.msra.mxu0 0
    %953 = vmatprep.subr.bf16.mxu0 0
    %954 = vmatpush1.bf16.msra.mxu0 0
    %955 = vmatprep.subr.bf16.mxu0 0
    %956 = vmatpush1.bf16.msra.mxu0 0
    %957 = vmatprep.subr.bf16.mxu0 0
    %958 = vmatpush1.bf16.msra.mxu0 0
    %959 = vmatprep.mubr.bf16.mxu0 0
    %960 = vmatmul.mubr.bf16.gmra.mrb[0].mxu0 %v925
    %v961 = vpop.f32.mrb[0].mxu0
    %v962 = vadd.f32 0.0, %v961
    %v963 = vpop.f32.mrb[0].mxu0
    %v964 = vpop.f32.mrb[0].mxu0
    %v965 = vpop.f32.mrb[0].mxu0
    %966 = vdwg.mxu0
    %v967 = vadd.f32 %v919, %v962
    %v968 = vxor.u32 %v967, 2147483648
    %v969 = vmul.f32 %v968, 1.442695
    %v970 = vpow.pop %v969
    %v971 = vadd.f32 %v970, 1.0
    %v972 = vrcp.pop %v971
    %v973 = vmul.f32 1.0, %v972
    %v974 = vmul.f32 %v973, 2.0
    %v975 = vsub.f32 %v974, 1.0
    %v976 = vmul.f32 %v973, %v909
    %978 = vrot.lane.b32.xlu0 %v975, 64
    %v979 = vpop.permute.xlu0 %978
    %v981 = vmul.f32 %v973, %v979
    %983 = vrot.lane.b32.xlu0 %v981, 32
    %v984 = vpop.permute.xlu0 %983
    %v986 = vadd.f32 %v976, %v984
    %v987 = vtanh.pop %v986
    %989 = vrot.lane.b32.xlu0 %v987, 64
    %v990 = vpop.permute.xlu0 %989
    %v992 = vmul.f32 %v973, %v990
    %s993 = smul.u32 7, 2
    %s994 = smul.addr %s993, 8
    %s995 = scalar_lea.vmem [#allocation2], %s994
    %v996 = vld [vmem:[%s995] sm:$0xff]
    %v997 = vpack.c.bf16 %v992, %v992
    %999 = vrot.lane.b32.xlu0 %v997, 32
    %v1000 = vpop.permute.xlu0 %999
    %v1002 = vsel %vm461, %v1000, 0
    %1004 = vmatprep.subr.bf16.mxu0 0
    %1005 = vmatpush1.bf16.msra.mxu0 %v457
    %1006 = vmatprep.subr.bf16.mxu0 0
    %1007 = vmatpush1.bf16.msra.mxu0 %v458
    %1008 = vmatprep.subr.bf16.mxu0 0
    %1009 = vmatpush1.bf16.msra.mxu0 0
    %1010 = vmatprep.subr.bf16.mxu0 0
    %1011 = vmatpush1.bf16.msra.mxu0 0
    %1012 = vmatprep.subr.bf16.mxu0 0
    %1013 = vmatpush1.bf16.msra.mxu0 0
    %1014 = vmatprep.subr.bf16.mxu0 0
    %1015 = vmatpush1.bf16.msra.mxu0 0
    %1016 = vmatprep.subr.bf16.mxu0 0
    %1017 = vmatpush1.bf16.msra.mxu0 0
    %1018 = vmatprep.subr.bf16.mxu0 0
    %1019 = vmatpush1.bf16.msra.mxu0 0
    %1020 = vmatprep.subr.bf16.mxu0 0
    %1021 = vmatpush1.bf16.msra.mxu0 0
    %1022 = vmatprep.subr.bf16.mxu0 0
    %1023 = vmatpush1.bf16.msra.mxu0 0
    %1024 = vmatprep.subr.bf16.mxu0 0
    %1025 = vmatpush1.bf16.msra.mxu0 0
    %1026 = vmatprep.subr.bf16.mxu0 0
    %1027 = vmatpush1.bf16.msra.mxu0 0
    %1028 = vmatprep.subr.bf16.mxu0 0
    %1029 = vmatpush1.bf16.msra.mxu0 0
    %1030 = vmatprep.subr.bf16.mxu0 0
    %1031 = vmatpush1.bf16.msra.mxu0 0
    %1032 = vmatprep.subr.bf16.mxu0 0
    %1033 = vmatpush1.bf16.msra.mxu0 0
    %1034 = vmatprep.subr.bf16.mxu0 0
    %1035 = vmatpush1.bf16.msra.mxu0 0
    %1036 = vmatprep.mubr.bf16.mxu0 0
    %1037 = vmatmul.mubr.bf16.gmra.mrb[0].mxu0 %v1002
    %v1038 = vpop.f32.mrb[0].mxu0
    %v1039 = vadd.f32 0.0, %v1038
    %v1040 = vpop.f32.mrb[0].mxu0
    %v1041 = vpop.f32.mrb[0].mxu0
    %v1042 = vpop.f32.mrb[0].mxu0
    %1043 = vdwg.mxu0
    %v1044 = vadd.f32 %v996, %v1039
    %v1045 = vxor.u32 %v1044, 2147483648
    %v1046 = vmul.f32 %v1045, 1.442695
    %v1047 = vpow.pop %v1046
    %v1048 = vadd.f32 %v1047, 1.0
    %v1049 = vrcp.pop %v1048
    %v1050 = vmul.f32 1.0, %v1049
    %v1051 = vmul.f32 %v1050, 2.0
    %v1052 = vsub.f32 %v1051, 1.0
    %v1053 = vmul.f32 %v1050, %v986
    %1055 = vrot.lane.b32.xlu0 %v1052, 64
    %v1056 = vpop.permute.xlu0 %1055
    %v1058 = vmul.f32 %v1050, %v1056
    %1060 = vrot.lane.b32.xlu0 %v1058, 32
    %v1061 = vpop.permute.xlu0 %1060
    %v1063 = vadd.f32 %v1053, %v1061
    %v1064 = vtanh.pop %v1063
    %1066 = vrot.lane.b32.xlu0 %v1064, 64
    %v1067 = vpop.permute.xlu0 %1066
    %v1069 = vmul.f32 %v1050, %v1067
    %1071 = vrot.lane.b32.xlu0 %v1069, 32
    %v1072 = vpop.permute.xlu0 %1071
    %1075 = vrot.lane.b32.xlu0 %v440, 64
    %v1076 = vpop.permute.xlu0 %1075
    %v1078 = vsel %vm461, %v1072, %v1076
    %v1079 = vpack.c.bf16 %v1078, %v1078
    %v1080 = vld [vmem:[#allocation9] sm:$0xf]
    %v1081 = vld [vmem:[#allocation9 + $0x4] sm:$0xf]
    %v1082 = vld [vmem:[#allocation9 + $0x8] sm:$0xf]
    %v1083 = vld [vmem:[#allocation9 + $0xc] sm:$0xf]
    %v1084 = vld [vmem:[#allocation9 + $0x10] sm:$0xf]
    %v1085 = vld [vmem:[#allocation9 + $0x14] sm:$0xf]
    %v1086 = vld [vmem:[#allocation9 + $0x18] sm:$0xf]
    %v1087 = vld [vmem:[#allocation9 + $0x1c] sm:$0xf]
    %v1088 = vld [vmem:[%s5] sm:$0x1]
    %v1090 = vlaneseq
    %v1091 = vshrl.u32 %v1090, 7
    %v1092 = vsub.s32 0, %v1091
    %v1093 = vrot.slane %v1088, %v1092
    %v1103 = vunpack.c.l.b16 %v1080
    %v1104 = vunpack.c.l.b16 %v1081
    %v1105 = vunpack.c.l.b16 %v1082
    %v1106 = vunpack.c.l.b16 %v1083
    %v1107 = vunpack.c.l.b16 %v1084
    %v1108 = vunpack.c.l.b16 %v1085
    %v1109 = vunpack.c.l.b16 %v1086
    %v1110 = vunpack.c.l.b16 %v1087
    %v1111 = vpack.c.b16 %v1104, %v1103
    %v1112 = vpack.c.b16 %v1106, %v1105
    %v1113 = vpack.c.b16 %v1108, %v1107
    %v1114 = vpack.c.b16 %v1110, %v1109
    %vm1119 = vcmask 523264
    %v1121 = vsel %vm1119, %v1079, 0
    %1123 = vmatprep.subr.bf16.mxu0 0
    %1124 = vmatpush1.bf16.msra.mxu0 %v1111
    %1125 = vmatprep.subr.bf16.mxu0 0
    %1126 = vmatpush1.bf16.msra.mxu0 %v1112
    %1127 = vmatprep.subr.bf16.mxu0 0
    %1128 = vmatpush1.bf16.msra.mxu0 %v1113
    %1129 = vmatprep.subr.bf16.mxu0 0
    %1130 = vmatpush1.bf16.msra.mxu0 %v1114
    %1131 = vmatprep.subr.bf16.mxu0 0
    %1132 = vmatpush1.bf16.msra.mxu0 0
    %1133 = vmatprep.subr.bf16.mxu0 0
    %1134 = vmatpush1.bf16.msra.mxu0 0
    %1135 = vmatprep.subr.bf16.mxu0 0
    %1136 = vmatpush1.bf16.msra.mxu0 0
    %1137 = vmatprep.subr.bf16.mxu0 0
    %1138 = vmatpush1.bf16.msra.mxu0 0
    %1139 = vmatprep.subr.bf16.mxu0 0
    %1140 = vmatpush1.bf16.msra.mxu0 0
    %1141 = vmatprep.subr.bf16.mxu0 0
    %1142 = vmatpush1.bf16.msra.mxu0 0
    %1143 = vmatprep.subr.bf16.mxu0 0
    %1144 = vmatpush1.bf16.msra.mxu0 0
    %1145 = vmatprep.subr.bf16.mxu0 0
    %1146 = vmatpush1.bf16.msra.mxu0 0
    %1147 = vmatprep.subr.bf16.mxu0 0
    %1148 = vmatpush1.bf16.msra.mxu0 0
    %1149 = vmatprep.subr.bf16.mxu0 0
    %1150 = vmatpush1.bf16.msra.mxu0 0
    %1151 = vmatprep.subr.bf16.mxu0 0
    %1152 = vmatpush1.bf16.msra.mxu0 0
    %1153 = vmatprep.subr.bf16.mxu0 0
    %1154 = vmatpush1.bf16.msra.mxu0 0
    %1155 = vmatprep.mubr.bf16.mxu0 0
    %1156 = vmatmul.mubr.bf16.gmra.mrb[0].mxu0 %v1121
    %v1157 = vpop.f32.mrb[0].mxu0
    %v1158 = vadd.f32 %v1093, %v1157
    %v1159 = vpop.f32.mrb[0].mxu0
    %v1160 = vpop.f32.mrb[0].mxu0
    %v1161 = vpop.f32.mrb[0].mxu0
    %1162 = vdwg.mxu0
    %1163 = vst [vmem:[#allocation11] sm:$0xff] %v1158
    // Predicated region
    $region42: #{tpu_custom_call.1} parent=1 // pred_check
      _
    $region43: #{tpu_custom_call.1} parent=1 // pred_check_branch
      %1165 = sbr.rel (0) target = $region45
    $region44: #{tpu_custom_call.1} parent=1 // pred_region
      %s1167 = ssub.s32 128, 128
      %1168 = vsyncadd [#allocation5], %s1167
      %s1170 = sshll.u32 [#allocation11], 4
      %s1171 = int_to_ptr.vmem [resolvable:$true] %s1170
      %1173 = dma.vmem_to_hbm [thread:$0]  %s1171, 128, %s6, [#allocation5]
    $region45: #{tpu_custom_call.1} parent=1 // pred_fallthru
      _
    // Predicated region
    $region46: #{tpu_custom_call.1} parent=1 // pred_check
      _
    $region47: #{tpu_custom_call.1} parent=1 // pred_check_branch
      %1175 = sbr.rel (0) target = $region49
    $region48: #{tpu_custom_call.1} parent=1 // pred_region
      %1176 = dma.done [#allocation5], 128
    $region49: #{tpu_custom_call.1} parent=1 // pred_fallthru
      _
    %1177 = vsyncpa [#allocation4], 1
    %1178 = vsyncpa [#allocation7], 1
    %1179 = vsyncpa [#allocation10], 1
    %1180 = vsyncpa [#allocation5], 1

</llo_original>
